<compile_context>
chip_gen: v7x
topology: tpu7x:2x2x1
jax: 0.10.0
libtpu: 0.0.40
codegen_flags: <defaults>
</compile_context>

<pallas_src>
import functools

import jax
import jax.numpy as jnp
import numpy as np
from jax import lax
from jax.experimental import pallas as pl
from jax.experimental.pallas import tpu as pltpu


def _mha_decoder_kernel(x_ref, w_qkv_ref, b_qkv_ref, wo_ref, bo_ref, o_ref,
                        *, num_heads, head_dim):
    C = num_heads * head_dim
    HW = x_ref.shape[-1]

    x = x_ref[0]                                             # (3C, HW) bf16

    # Fused Q/K/V projection: a single bf16 MXU matmul (block-diagonal weight;
    # the softmax scale is already folded into the Wq / bq blocks).
    qkv = jnp.dot(w_qkv_ref[...], x,
                  preferred_element_type=jnp.float32)        # (3C, HW) f32
    qkv = qkv + b_qkv_ref[...]                               # bias, lane broadcast

    # Slice q/k/v from the f32 result (sublane-tile aligned when C % 8 == 0),
    # cast to bf16 for the MXU, and split heads into a leading batch dim.
    def split_heads(lo):
        return qkv[lo:lo + C].astype(jnp.bfloat16).reshape(num_heads, head_dim, HW)

    q = split_heads(0)                                       # (nh, hd, HW)
    k = split_heads(C)
    v = split_heads(2 * C)

    # Transposed-scores orientation:
    #   scores_t[h, pk, pq] = sum_d k[h, d, pk] * q[h, d, pq]
    # Downstream, both (HW, HW)-sized operands stay in their natural
    # orientation; only the tiny (hd, HW) lhs may need a compiler transpose.
    scores_t = lax.dot_general(
        k, q,
        dimension_numbers=(((1,), (1,)), ((0,), (0,))),
        preferred_element_type=jnp.float32)                  # (nh, HW_k, HW_q) f32

    # Softmax over the key axis (axis 1).
    m = jnp.max(scores_t, axis=1, keepdims=True)             # (nh, 1, HW_q)
    e = jnp.exp(scores_t - m)
    inv = pl.reciprocal(jnp.sum(e, axis=1, keepdims=True), approx=True)
    w_t = (e * inv).astype(jnp.bfloat16)                     # (nh, HW_k, HW_q)

    # attn[h, d, pq] = sum_pk v[h, d, pk] * w_t[h, pk, pq]
    # lhs (hd, HW_k) is natural (M, K); rhs (HW_k, HW_q) is natural (K, N):
    # no transpose of the large attention-weights matrix.
    attn = lax.dot_general(
        v, w_t,
        dimension_numbers=(((2,), (1,)), ((0,), (0,))),
        preferred_element_type=jnp.float32)                  # (nh, hd, HW_q) f32

    # Heads fold back to channels-first (C, HW): pure reshape, no scratch/concat.
    attn_c = attn.reshape(C, HW).astype(jnp.bfloat16)

    # Output 1x1 conv: (C, C) @ (C, HW) + b.  Lane-dense f32 store.
    out = jnp.dot(wo_ref[...], attn_c,
                  preferred_element_type=jnp.float32) + bo_ref[...]
    o_ref[0] = out.astype(o_ref.dtype)


def mha_decoder_pallas(query, key, value, params, *, num_heads):
    """query/key/value: (B, C, H, W) float32 (NCHW, same as PyTorch)."""
    B, C, H, W = query.shape
    assert C % num_heads == 0
    head_dim = C // num_heads
    HW = H * W
    scale = 1.0 / (head_dim ** 0.5)

    # NCHW -> (B, C, HW): pure reshape.  Channel-concat q|k|v so each grid step
    # gets one fused (3C, HW) input block; bf16 cast halves activation DMA.
    x_qkv = jnp.concatenate(
        [query.reshape(B, C, HW), key.reshape(B, C, HW), value.reshape(B, C, HW)],
        axis=1).astype(jnp.bfloat16)                         # (B, 3C, HW)

    # Fused block-diagonal QKV weight with the softmax scale folded into Wq/bq.
    wq = params["wq"].reshape(C, C) * scale
    wk = params["wk"].reshape(C, C)
    wv = params["wv"].reshape(C, C)
    w_qkv = jnp.zeros((3 * C, 3 * C), jnp.float32)
    w_qkv = w_qkv.at[0:C, 0:C].set(wq)
    w_qkv = w_qkv.at[C:2 * C, C:2 * C].set(wk)
    w_qkv = w_qkv.at[2 * C:, 2 * C:].set(wv)
    w_qkv = w_qkv.astype(jnp.bfloat16)
    # TODO(synk): for large C (>~128) the block-diagonal fusion wastes 2/3 of
    # the MXU FLOPs; switch back to three separate (C, C) matmuls there.

    b_qkv = jnp.concatenate(
        [params["bq"] * scale, params["bk"], params["bv"]],
        axis=0).reshape(3 * C, 1).astype(jnp.float32)

    wo = params["wo"].reshape(C, C).astype(jnp.bfloat16)
    bo = params["bo"].reshape(C, 1).astype(jnp.float32)

    x_spec = pl.BlockSpec((1, 3 * C, HW), lambda b: (b, 0, 0))
    o_spec = pl.BlockSpec((1, C, HW), lambda b: (b, 0, 0))
    wqkv_spec = pl.BlockSpec((3 * C, 3 * C), lambda b: (0, 0))
    bqkv_spec = pl.BlockSpec((3 * C, 1), lambda b: (0, 0))
    wo_spec = pl.BlockSpec((C, C), lambda b: (0, 0))
    bo_spec = pl.BlockSpec((C, 1), lambda b: (0, 0))

    kernel = functools.partial(
        _mha_decoder_kernel, num_heads=num_heads, head_dim=head_dim)

    # Explicit scoped-VMEM budget: double-buffered I/O blocks + weights +
    # softmax intermediates, ~4x headroom, capped at v7x's 64 MiB physical VMEM.
    io_bytes = 2 * (3 * C * HW * 2 + C * HW * 4)
    wt_bytes = (9 * C * C + C * C) * 2 + (3 * C + C) * 4
    sm_bytes = num_heads * HW * HW * (4 + 4 + 2)   # scores_t + exp (f32) + bf16 weights
    vmem_limit = int(min(64 * 1024 * 1024,
                         max(16 * 1024 * 1024,
                             4 * (io_bytes + wt_bytes + sm_bytes))))

    # TODO(synk): for HW >~ 1.5-2K add a flash-style query-tile grid axis
    # ("arbitrary", pl.when init/finalize) so (HW, HW) intermediates fit v7x's
    # 64 MiB VMEM; for very large B with tiny HW, block several batch elements
    # per grid step to amortize the ~0.35 us per-step overhead.
    out_t = pl.pallas_call(
        kernel,
        out_shape=jax.ShapeDtypeStruct((B, C, HW), query.dtype),
        grid_spec=pltpu.PrefetchScalarGridSpec(
            num_scalar_prefetch=0,
            grid=(B,),                 # B >= 2 parallel steps -> both v7x TCs busy
            in_specs=[x_spec, wqkv_spec, bqkv_spec, wo_spec, bo_spec],
            out_specs=o_spec,
        ),
        compiler_params=pltpu.CompilerParams(
            dimension_semantics=("parallel",),
            vmem_limit_bytes=vmem_limit),
    )(x_qkv, w_qkv, b_qkv, wo, bo)

    # (B, C, HW) -> NCHW: pure reshape.
    return out_t.reshape(B, C, H, W)


def mha_decoder_reference(query, key, value, params, *, num_heads):
    """Pure-JAX f32 reference mirroring the PyTorch forward exactly."""
    B, C, H, W = query.shape
    head_dim = C // num_heads
    HW = H * W

    def conv1x1(x, w, b):
        y = jnp.einsum('bihw,oi->bohw', x, w.reshape(C, C))
        return y + b.reshape(1, C, 1, 1)

    q = conv1x1(query, params["wq"], params["bq"]).reshape(B, num_heads, head_dim, HW)
    k = conv1x1(key, params["wk"], params["bk"]).reshape(B, num_heads, head_dim, HW)
    v = conv1x1(value, params["wv"], params["bv"]).reshape(B, num_heads, head_dim, HW)

    qT = jnp.transpose(q, (0, 1, 3, 2))                        # (B, nh, HW, hd)
    scores = jnp.matmul(qT, k) / (head_dim ** 0.5)             # (B, nh, HW, HW)
    weights = jax.nn.softmax(scores, axis=-1)
    attn = jnp.matmul(weights, jnp.transpose(v, (0, 1, 3, 2)))  # (B, nh, HW, hd)
    attn = jnp.transpose(attn, (0, 1, 3, 2)).reshape(B, C, H, W)
    return conv1x1(attn, params["wo"], params["bo"])


if __name__ == "__main__":
    B, C, H, W = 2, 8, 16, 16
    num_heads = 2

    key0 = jax.random.PRNGKey(0)
    ks = jax.random.split(key0, 12)

    def winit(k):
        bound = 1.0 / np.sqrt(C)   # matches Conv2d(k=1) default init scale
        return jax.random.uniform(k, (C, C, 1, 1), jnp.float32, -bound, bound)

    def binit(k):
        bound = 1.0 / np.sqrt(C)
        return jax.random.uniform(k, (C,), jnp.float32, -bound, bound)

    params = {
        "wq": winit(ks[0]), "bq": binit(ks[1]),
        "wk": winit(ks[2]), "bk": binit(ks[3]),
        "wv": winit(ks[4]), "bv": binit(ks[5]),
        "wo": winit(ks[6]), "bo": binit(ks[7]),
    }

    query = jax.random.normal(ks[8], (B, C, H, W), jnp.float32)
    key_in = jax.random.normal(ks[9], (B, C, H, W), jnp.float32)
    value = jax.random.normal(ks[10], (B, C, H, W), jnp.float32)

    out = mha_decoder_pallas(query, key_in, value, params, num_heads=num_heads)
    out = jax.block_until_ready(out)

    ref = mha_decoder_reference(query, key_in, value, params, num_heads=num_heads)
    # Tolerance vs pure-f32 reference: all matmuls use bf16 MXU operands
    # (f32 accumulation) and the softmax denominator uses the approx EUP
    # reciprocal, so allow ~5e-2 end-to-end drift.
    np.testing.assert_allclose(np.asarray(out), np.asarray(ref), rtol=5e-2, atol=5e-2)

    print("KERNEL_OK")
</pallas_src>

<mosaic_0001>
module attributes {stable_mosaic.version = 11 : i64} {
  func.func @_mha_decoder_kernel(%arg0: i32, %arg1: memref<1x24x256xbf16, #tpu.memory_space<vmem>>, %arg2: memref<24x24xbf16, #tpu.memory_space<vmem>>, %arg3: memref<24x1xf32, #tpu.memory_space<vmem>>, %arg4: memref<8x8xbf16, #tpu.memory_space<vmem>>, %arg5: memref<8x1xf32, #tpu.memory_space<vmem>>, %arg6: memref<1x8x256xf32, #tpu.memory_space<vmem>>) attributes {dimension_semantics = [#tpu.dimension_semantics<parallel>], iteration_bounds = array<i64: 2>, scalar_prefetch = 0 : i64, scratch_operands = 0 : i64, tpu.core_type = #tpu.core_type<tc>, window_params = [{transform_indices = @transform_0, window_bounds = array<i64: 1, 24, 256>}, {pipeline_mode = #tpu.pipeline_mode<synchronous>, transform_indices = @transform_1, window_bounds = array<i64: 24, 24>}, {pipeline_mode = #tpu.pipeline_mode<synchronous>, transform_indices = @transform_2, window_bounds = array<i64: 24, 1>}, {pipeline_mode = #tpu.pipeline_mode<synchronous>, transform_indices = @transform_3, window_bounds = array<i64: 8, 8>}, {pipeline_mode = #tpu.pipeline_mode<synchronous>, transform_indices = @transform_4, window_bounds = array<i64: 8, 1>}, {transform_indices = @transform_5, window_bounds = array<i64: 1, 8, 256>}]} {
    %c0 = arith.constant 0 : index
    %c0_0 = arith.constant 0 : index
    %c0_1 = arith.constant 0 : index
    %0 = vector.load %arg1[%c0, %c0_0, %c0_1] : memref<1x24x256xbf16, #tpu.memory_space<vmem>>, vector<1x24x256xbf16>
    %1 = vector.shape_cast %0 : vector<1x24x256xbf16> to vector<24x256xbf16>
    %c0_2 = arith.constant 0 : index
    %c0_3 = arith.constant 0 : index
    %2 = vector.load %arg2[%c0_2, %c0_3] : memref<24x24xbf16, #tpu.memory_space<vmem>>, vector<24x24xbf16>
    %cst = arith.constant dense<0.000000e+00> : vector<24x256xf32>
    %3 = tpu.matmul %2, %1, %cst {dimension_numbers = #tpu.dot_dimension_numbers<[1], [0], [0], [1], [0, 0, 1, 1], [], []>} : vector<24x24xbf16>, vector<24x256xbf16>, vector<24x256xf32> -> vector<24x256xf32>
    %c0_4 = arith.constant 0 : index
    %c0_5 = arith.constant 0 : index
    %4 = vector.load %arg3[%c0_4, %c0_5] : memref<24x1xf32, #tpu.memory_space<vmem>>, vector<24x1xf32>
    %5 = vector.broadcast %4 : vector<24x1xf32> to vector<24x256xf32>
    %6 = arith.addf %3, %5 : vector<24x256xf32>
    %7 = vector.extract_strided_slice %6 {offsets = [0, 0], sizes = [8, 256], strides = [1, 1]} : vector<24x256xf32> to vector<8x256xf32>
    %8 = arith.truncf %7 : vector<8x256xf32> to vector<8x256xbf16>
    %9 = vector.shape_cast %8 : vector<8x256xbf16> to vector<2x4x256xbf16>
    %10 = vector.extract_strided_slice %6 {offsets = [8, 0], sizes = [8, 256], strides = [1, 1]} : vector<24x256xf32> to vector<8x256xf32>
    %11 = arith.truncf %10 : vector<8x256xf32> to vector<8x256xbf16>
    %12 = vector.shape_cast %11 : vector<8x256xbf16> to vector<2x4x256xbf16>
    %13 = vector.extract_strided_slice %6 {offsets = [16, 0], sizes = [8, 256], strides = [1, 1]} : vector<24x256xf32> to vector<8x256xf32>
    %14 = arith.truncf %13 : vector<8x256xf32> to vector<8x256xbf16>
    %15 = vector.shape_cast %14 : vector<8x256xbf16> to vector<2x4x256xbf16>
    %cst_6 = arith.constant dense<0.000000e+00> : vector<2x256x256xf32>
    %16 = tpu.matmul %12, %9, %cst_6 {dimension_numbers = #tpu.dot_dimension_numbers<[1], [1], [2], [2], [0, 0, 0, 2, 1, 2], [0], [0]>} : vector<2x4x256xbf16>, vector<2x4x256xbf16>, vector<2x256x256xf32> -> vector<2x256x256xf32>
    %cst_7 = arith.constant dense<0xFF800000> : vector<2x256xf32>
    %17 = vector.multi_reduction <maximumf>, %16, %cst_7 [1] : vector<2x256x256xf32> to vector<2x256xf32>
    %18 = vector.shape_cast %17 : vector<2x256xf32> to vector<2x1x256xf32>
    %19 = vector.broadcast %18 : vector<2x1x256xf32> to vector<2x256x256xf32>
    %20 = arith.subf %16, %19 : vector<2x256x256xf32>
    %21 = math.exp %20 : vector<2x256x256xf32>
    %cst_8 = arith.constant dense<0.000000e+00> : vector<2x256xf32>
    %22 = vector.multi_reduction <add>, %21, %cst_8 [1] : vector<2x256x256xf32> to vector<2x256xf32>
    %23 = vector.shape_cast %22 : vector<2x256xf32> to vector<2x1x256xf32>
    %24 = tpu.reciprocal %23 {approx = true} : vector<2x1x256xf32> -> vector<2x1x256xf32>
    %25 = vector.broadcast %24 : vector<2x1x256xf32> to vector<2x256x256xf32>
    %26 = arith.mulf %21, %25 : vector<2x256x256xf32>
    %27 = arith.truncf %26 : vector<2x256x256xf32> to vector<2x256x256xbf16>
    %cst_9 = arith.constant dense<0.000000e+00> : vector<2x4x256xf32>
    %28 = tpu.matmul %15, %27, %cst_9 {dimension_numbers = #tpu.dot_dimension_numbers<[2], [1], [1], [2], [0, 0, 0, 1, 1, 2], [0], [0]>} : vector<2x4x256xbf16>, vector<2x256x256xbf16>, vector<2x4x256xf32> -> vector<2x4x256xf32>
    %29 = vector.shape_cast %28 : vector<2x4x256xf32> to vector<8x256xf32>
    %30 = arith.truncf %29 : vector<8x256xf32> to vector<8x256xbf16>
    %c0_10 = arith.constant 0 : index
    %c0_11 = arith.constant 0 : index
    %31 = vector.load %arg4[%c0_10, %c0_11] : memref<8x8xbf16, #tpu.memory_space<vmem>>, vector<8x8xbf16>
    %cst_12 = arith.constant dense<0.000000e+00> : vector<8x256xf32>
    %32 = tpu.matmul %31, %30, %cst_12 {dimension_numbers = #tpu.dot_dimension_numbers<[1], [0], [0], [1], [0, 0, 1, 1], [], []>} : vector<8x8xbf16>, vector<8x256xbf16>, vector<8x256xf32> -> vector<8x256xf32>
    %c0_13 = arith.constant 0 : index
    %c0_14 = arith.constant 0 : index
    %33 = vector.load %arg5[%c0_13, %c0_14] : memref<8x1xf32, #tpu.memory_space<vmem>>, vector<8x1xf32>
    %34 = vector.broadcast %33 : vector<8x1xf32> to vector<8x256xf32>
    %35 = arith.addf %32, %34 : vector<8x256xf32>
    %c0_15 = arith.constant 0 : index
    %c0_16 = arith.constant 0 : index
    %c0_17 = arith.constant 0 : index
    %36 = vector.load %arg6[%c0_15, %c0_16, %c0_17] : memref<1x8x256xf32, #tpu.memory_space<vmem>>, vector<1x8x256xf32>
    %37 = vector.shape_cast %36 : vector<1x8x256xf32> to vector<8x256xf32>
    %38 = vector.shape_cast %35 : vector<8x256xf32> to vector<1x8x256xf32>
    tpu.vector_store %arg6[%c0_15, %c0_16, %c0_17], %38 {strides = array<i32>} : memref<1x8x256xf32, #tpu.memory_space<vmem>>, vector<1x8x256xf32>,
    return
  }
  func.func @transform_0(%arg0: i32) -> (i32, i32, i32) {
    %c0_i32 = arith.constant 0 : i32
    %c0_i32_0 = arith.constant 0 : i32
    %c0_i32_1 = arith.constant 0 : i32
    return %arg0, %c0_i32, %c0_i32_0 : i32, i32, i32
  }
  func.func @transform_1(%arg0: i32) -> (i32, i32) {
    %c0_i32 = arith.constant 0 : i32
    %c0_i32_0 = arith.constant 0 : i32
    %c0_i32_1 = arith.constant 0 : i32
    return %c0_i32, %c0_i32_0 : i32, i32
  }
  func.func @transform_2(%arg0: i32) -> (i32, i32) {
    %c0_i32 = arith.constant 0 : i32
    %c0_i32_0 = arith.constant 0 : i32
    %c0_i32_1 = arith.constant 0 : i32
    return %c0_i32, %c0_i32_0 : i32, i32
  }
  func.func @transform_3(%arg0: i32) -> (i32, i32) {
    %c0_i32 = arith.constant 0 : i32
    %c0_i32_0 = arith.constant 0 : i32
    %c0_i32_1 = arith.constant 0 : i32
    return %c0_i32, %c0_i32_0 : i32, i32
  }
  func.func @transform_4(%arg0: i32) -> (i32, i32) {
    %c0_i32 = arith.constant 0 : i32
    %c0_i32_0 = arith.constant 0 : i32
    %c0_i32_1 = arith.constant 0 : i32
    return %c0_i32, %c0_i32_0 : i32, i32
  }
  func.func @transform_5(%arg0: i32) -> (i32, i32, i32) {
    %c0_i32 = arith.constant 0 : i32
    %c0_i32_0 = arith.constant 0 : i32
    %c0_i32_1 = arith.constant 0 : i32
    return %arg0, %c0_i32, %c0_i32_0 : i32, i32, i32
  }
}

</mosaic_0001>

<llo_original>
// kernel: tpu_custom_call.1
$region0: #{tpu_custom_call.1}
  #allocation0 [shape = 'u32[]', space=smem, size = 0x4, offset = 0x4, fixed_abs, tag = 'smem constant byte address 0x4 - core index']
  #allocation1 [shape = 'u32[144,128]{1,0:T(1,128)}', space=vmem, size = 0x12000, scoped, tag = 'internal scratch']
  %s0 = inlined_call_operand.hbm [shape: bf16[2,24,256], index: 0, kind: input, shape index: {}]
  %s1 = inlined_call_operand.vmem [shape: bf16[24,24], index: 1, kind: input, shape index: {}]
  %s2 = inlined_call_operand.vmem [shape: f32[24,1], index: 2, kind: input, shape index: {}]
  %s3 = inlined_call_operand.vmem [shape: bf16[8,8], index: 3, kind: input, shape index: {}]
  %s4 = inlined_call_operand.vmem [shape: f32[8,1], index: 4, kind: input, shape index: {}]
  %s5 = inlined_call_operand.hbm [shape: f32[2,8,256], index: 5, kind: output, shape index: {}]
  %s6 = sld [smem:[#allocation0]]
  $region57: #{tpu_custom_call.1} parent=0
    _
  %s8 = ssub.s32 1, %s6
  %s9 = scalar_select 0, %s8, %s6
  $region1: #{tpu_custom_call.1} parent=0
    #allocation2 [shape = 'u8[24576]{0}', space=vmem, size = 0x6000, scoped, tag = 'input window, operand 0']
    #allocation3 [shape = 's32[2]{0}', space=sflag, size = 0x8, scoped, tag = 'scoped memory for tpu_custom_call.1']
    #allocation4 [shape = 's32[2]{0}', space=sflag, size = 0x8, scoped, tag = 'scoped memory for tpu_custom_call.1']
    #allocation5 [shape = 'u8[16384]{0}', space=vmem, size = 0x4000, scoped, tag = 'output window, operand 0']
    %10 = vsyncpa [#allocation3], 0
    %s11 = scalar_lea.sflag [#allocation3], 1
    %12 = vsyncpa %s11, 0
    %13 = vsyncpa [#allocation4], 0
    %s14 = scalar_lea.sflag [#allocation4], 1
    %15 = vsyncpa %s14, 0
    loop: start=0, step=1, limit=4
    $region2: #{tpu_custom_call.1} parent=1 // loop_pre_header
      _
    $region3: #{tpu_custom_call.1} parent=1 // loop_header
      %s17 = sphi 0, %s21
      %p18 = scmp.ge.s32.totalorder %s17, 4
      %s27 = sphi 0, %s29
      %s30 = sphi 0, %s27
      %s31 = sphi 0, %s30
      %s47 = sphi 0, %s31
      %s51 = sphi 0, %s51
      %s53 = sphi 0, %s51
      %s54 = sphi 0, %s53
      %s68 = sphi 0, %s54
      %s72 = sphi 0, %s72
      %s74 = sphi 0, %s72
      %s75 = sphi 0, %s74
      %s89 = sphi 0, %s75
      %s93 = sphi 0, %s93
      %s95 = sphi 0, %s93
      %s96 = sphi 0, %s95
      %s110 = sphi 0, %s96
      %s114 = sphi 0, %s114
      %s116 = sphi 0, %s114
      %s117 = sphi 0, %s116
      %s131 = sphi 0, %s117
      %s137 = sphi 0, %s139
      %s140 = sphi 0, %s137
      %s141 = sphi 0, %s140
      %s157 = sphi 0, %s141
    $region4: #{tpu_custom_call.1} parent=1 // loop_header_branch
      %20 = sbr.rel (%p18) target = $region8
    $region5: #{tpu_custom_call.1} parent=1 // loop_body
      %s22 = ssub.s32 %s17, 1
      %s23 = ssub.s32 %s17, 2
      %s24 = sadd.s32 %s17, 1
      %s25 = ssub.s32 %s17, %s24
      %p26 = scmp.eq.s32.totalorder %s25, 0
      %s28 = sadd.s32 %s27, 1
      %s29 = scalar_select %p26, %s27, %s28
      %p32 = pneg %p26
      %p33 = scmp.eq.s32.totalorder %s17, 1
      %p34 = por %p32, %p33
      %p35 = scmp.ne.s32.totalorder %s27, %s30
      %p36 = scmp.eq.s32.totalorder %s17, 0
      %p37 = por %p35, %p36
      %p38 = scmp.ne.s32.totalorder %s27, %s30
      %p39 = scmp.eq.s32.totalorder %s22, 1
      %p40 = por %p38, %p39
      %p41 = scmp.ne.s32.totalorder %s30, %s31
      %p42 = scmp.eq.s32.totalorder %s22, 0
      %p43 = por %p41, %p42
      %p44 = scmp.ne.s32.totalorder %s30, %s31
      %p45 = scmp.eq.s32.totalorder %s23, 1
      %p46 = por %p44, %p45
      %p48 = scmp.ne.s32.totalorder %s31, %s47
      %p49 = scmp.eq.s32.totalorder %s23, 0
      %p50 = por %p48, %p49
      %s52 = sadd.s32 %s51, 1
      %p55 = scmp.eq.s32.totalorder %s17, 1
      %p56 = scmp.ne.s32.totalorder %s51, %s53
      %p57 = scmp.eq.s32.totalorder %s17, 0
      %p58 = por %p56, %p57
      %p59 = scmp.ne.s32.totalorder %s51, %s53
      %p60 = scmp.eq.s32.totalorder %s22, 1
      %p61 = por %p59, %p60
      %p62 = scmp.ne.s32.totalorder %s53, %s54
      %p63 = scmp.eq.s32.totalorder %s22, 0
      %p64 = por %p62, %p63
      %p65 = scmp.ne.s32.totalorder %s53, %s54
      %p66 = scmp.eq.s32.totalorder %s23, 1
      %p67 = por %p65, %p66
      %p69 = scmp.ne.s32.totalorder %s54, %s68
      %p70 = scmp.eq.s32.totalorder %s23, 0
      %p71 = por %p69, %p70
      %s73 = sadd.s32 %s72, 1
      %p76 = scmp.eq.s32.totalorder %s17, 1
      %p77 = scmp.ne.s32.totalorder %s72, %s74
      %p78 = scmp.eq.s32.totalorder %s17, 0
      %p79 = por %p77, %p78
      %p80 = scmp.ne.s32.totalorder %s72, %s74
      %p81 = scmp.eq.s32.totalorder %s22, 1
      %p82 = por %p80, %p81
      %p83 = scmp.ne.s32.totalorder %s74, %s75
      %p84 = scmp.eq.s32.totalorder %s22, 0
      %p85 = por %p83, %p84
      %p86 = scmp.ne.s32.totalorder %s74, %s75
      %p87 = scmp.eq.s32.totalorder %s23, 1
      %p88 = por %p86, %p87
      %p90 = scmp.ne.s32.totalorder %s75, %s89
      %p91 = scmp.eq.s32.totalorder %s23, 0
      %p92 = por %p90, %p91
      %s94 = sadd.s32 %s93, 1
      %p97 = scmp.eq.s32.totalorder %s17, 1
      %p98 = scmp.ne.s32.totalorder %s93, %s95
      %p99 = scmp.eq.s32.totalorder %s17, 0
      %p100 = por %p98, %p99
      %p101 = scmp.ne.s32.totalorder %s93, %s95
      %p102 = scmp.eq.s32.totalorder %s22, 1
      %p103 = por %p101, %p102
      %p104 = scmp.ne.s32.totalorder %s95, %s96
      %p105 = scmp.eq.s32.totalorder %s22, 0
      %p106 = por %p104, %p105
      %p107 = scmp.ne.s32.totalorder %s95, %s96
      %p108 = scmp.eq.s32.totalorder %s23, 1
      %p109 = por %p107, %p108
      %p111 = scmp.ne.s32.totalorder %s96, %s110
      %p112 = scmp.eq.s32.totalorder %s23, 0
      %p113 = por %p111, %p112
      %s115 = sadd.s32 %s114, 1
      %p118 = scmp.eq.s32.totalorder %s17, 1
      %p119 = scmp.ne.s32.totalorder %s114, %s116
      %p120 = scmp.eq.s32.totalorder %s17, 0
      %p121 = por %p119, %p120
      %p122 = scmp.ne.s32.totalorder %s114, %s116
      %p123 = scmp.eq.s32.totalorder %s22, 1
      %p124 = por %p122, %p123
      %p125 = scmp.ne.s32.totalorder %s116, %s117
      %p126 = scmp.eq.s32.totalorder %s22, 0
      %p127 = por %p125, %p126
      %p128 = scmp.ne.s32.totalorder %s116, %s117
      %p129 = scmp.eq.s32.totalorder %s23, 1
      %p130 = por %p128, %p129
      %p132 = scmp.ne.s32.totalorder %s117, %s131
      %p133 = scmp.eq.s32.totalorder %s23, 0
      %p134 = por %p132, %p133
      %s135 = ssub.s32 %s17, %s24
      %p136 = scmp.eq.s32.totalorder %s135, 0
      %s138 = sadd.s32 %s137, 1
      %s139 = scalar_select %p136, %s137, %s138
      %p142 = pneg %p136
      %p143 = scmp.eq.s32.totalorder %s17, 1
      %p144 = por %p142, %p143
      %p145 = scmp.ne.s32.totalorder %s137, %s140
      %p146 = scmp.eq.s32.totalorder %s17, 0
      %p147 = por %p145, %p146
      %p148 = scmp.ne.s32.totalorder %s137, %s140
      %p149 = scmp.eq.s32.totalorder %s22, 1
      %p150 = por %p148, %p149
      %p151 = scmp.ne.s32.totalorder %s140, %s141
      %p152 = scmp.eq.s32.totalorder %s22, 0
      %p153 = por %p151, %p152
      %p154 = scmp.ne.s32.totalorder %s140, %s141
      %p155 = scmp.eq.s32.totalorder %s23, 1
      %p156 = por %p154, %p155
      %p158 = scmp.ne.s32.totalorder %s141, %s157
      %p159 = scmp.eq.s32.totalorder %s23, 0
      %p160 = por %p158, %p159
      %p161 = scmp.le.s32.totalorder 1, %s17
      %p162 = scmp.lt.s32.totalorder %s17, 3
      %p163 = pnand %p161, %p162
      %p164 = pneg %p163
      // Predicated region
      $region9: #{tpu_custom_call.1} parent=5 // pred_check
        _
      $region10: #{tpu_custom_call.1} parent=5 // pred_check_branch
        %166 = sbr.rel (%p163) target = $region12
      $region11: #{tpu_custom_call.1} parent=5 // pred_region
        %s167 = ssub.s32 %s17, 1
        // Predicated region
        $region13: #{tpu_custom_call.1} parent=11 // pred_check
          %p168 = pneg %p64
        $region14: #{tpu_custom_call.1} parent=11 // pred_check_branch
          %170 = sbr.rel (%p168) target = $region16
        $region15: #{tpu_custom_call.1} parent=11 // pred_region
          _
        $region16: #{tpu_custom_call.1} parent=11 // pred_fallthru
          _
        // Predicated region
        $region17: #{tpu_custom_call.1} parent=11 // pred_check
          %p171 = pneg %p85
        $region18: #{tpu_custom_call.1} parent=11 // pred_check_branch
          %173 = sbr.rel (%p171) target = $region20
        $region19: #{tpu_custom_call.1} parent=11 // pred_region
          _
        $region20: #{tpu_custom_call.1} parent=11 // pred_fallthru
          _
        // Predicated region
        $region21: #{tpu_custom_call.1} parent=11 // pred_check
          %p174 = pneg %p106
        $region22: #{tpu_custom_call.1} parent=11 // pred_check_branch
          %176 = sbr.rel (%p174) target = $region24
        $region23: #{tpu_custom_call.1} parent=11 // pred_region
          _
        $region24: #{tpu_custom_call.1} parent=11 // pred_fallthru
          _
        // Predicated region
        $region25: #{tpu_custom_call.1} parent=11 // pred_check
          %p177 = pneg %p127
        $region26: #{tpu_custom_call.1} parent=11 // pred_check_branch
          %179 = sbr.rel (%p177) target = $region28
        $region27: #{tpu_custom_call.1} parent=11 // pred_region
          _
        $region28: #{tpu_custom_call.1} parent=11 // pred_fallthru
          _
      $region12: #{tpu_custom_call.1} parent=5 // pred_fallthru
        _
      %p180 = scmp.lt.s32.totalorder %s17, 2
      // Predicated region
      $region29: #{tpu_custom_call.1} parent=5 // pred_check
        %p181 = pneg %p180
      $region30: #{tpu_custom_call.1} parent=5 // pred_check_branch
        %183 = sbr.rel (%p181) target = $region32
      $region31: #{tpu_custom_call.1} parent=5 // pred_region
        // Predicated region
        $region33: #{tpu_custom_call.1} parent=31 // pred_check
          %p184 = pneg %p37
        $region34: #{tpu_custom_call.1} parent=31 // pred_check_branch
          %186 = sbr.rel (%p184) target = $region36
        $region35: #{tpu_custom_call.1} parent=31 // pred_region
          %s187 = sand.u32 %s27, 1
          %s188 = scalar_lea.sflag [#allocation3], %s187
          %s189 = sand.u32 %s27, 1
          %s190 = smul.addr %s189, 24
          %s191 = scalar_lea.vmem [#allocation2], %s190
          %s193 = ssub.s32 384, 384
          %194 = vsyncadd %s188, %s193
          %s195 = smul.addr %s17, 6
          %s196 = smul.addr %s195, 64
          %s197 = scalar_lea.hbm %s0, %s196
          %s198 = sshll.u32 %s191, 4
          %s199 = int_to_ptr.vmem [resolvable:$true] %s198
          %204 = dma.hbm_to_vmem [thread:$0]  %s197, 384, %s199, %s188, 128, 128, 8
        $region36: #{tpu_custom_call.1} parent=31 // pred_fallthru
          _
      $region32: #{tpu_custom_call.1} parent=5 // pred_fallthru
        _
      %p205 = scmp.le.s32.totalorder 1, %s17
      %p206 = scmp.lt.s32.totalorder %s17, 3
      %p207 = pnand %p205, %p206
      %p208 = pneg %p207
      // Predicated region
      $region37: #{tpu_custom_call.1} parent=5 // pred_check
        _
      $region38: #{tpu_custom_call.1} parent=5 // pred_check_branch
        %210 = sbr.rel (%p207) target = $region40
      $region39: #{tpu_custom_call.1} parent=5 // pred_region
        %s211 = ssub.s32 %s17, 1
        %s212 = sand.u32 %s30, 1
        %s213 = scalar_lea.sflag [#allocation3], %s212
        %s214 = sand.u32 %s30, 1
        %s215 = smul.addr %s214, 24
        %s216 = scalar_lea.vmem [#allocation2], %s215
        // Predicated region
        $region41: #{tpu_custom_call.1} parent=39 // pred_check
          %p217 = pneg %p43
        $region42: #{tpu_custom_call.1} parent=39 // pred_check_branch
          %219 = sbr.rel (%p217) target = $region44
        $region43: #{tpu_custom_call.1} parent=39 // pred_region
          %220 = dma.done %s213, 384
        $region44: #{tpu_custom_call.1} parent=39 // pred_fallthru
          _
        %s221 = sand.u32 %s30, 1
        %s222 = scalar_lea.sflag [#allocation3], %s221
        %s223 = sand.u32 %s30, 1
        %s224 = smul.addr %s223, 24
        %s225 = scalar_lea.vmem [#allocation2], %s224
        %p226 = pneg %p43
        %p227 = pneg %p40
        %p228 = pneg %p64
        %p229 = pneg %p61
        %p230 = pneg %p85
        %p231 = pneg %p82
        %p232 = pneg %p106
        %p233 = pneg %p103
        %p234 = pneg %p127
        %p235 = pneg %p124
        %p236 = pneg %p153
        %p237 = pneg %p150
        %s238 = sand.u32 %s140, 1
        %s239 = scalar_lea.sflag [#allocation4], %s238
        %s240 = sand.u32 %s140, 1
        %s241 = smul.addr %s240, 16
        %s242 = scalar_lea.vmem [#allocation5], %s241
        %v244 = vld [vmem:[%s216] sm:$0xff]
        %v245 = vld [vmem:[%s216 + $0x8] sm:$0xff]
        %v246 = vld [vmem:[%s216 + $0x10] sm:$0xff]
        %v247 = vld [vmem:[%s1] sm:$0xf]
        %v248 = vld [vmem:[%s1 + $0x4] sm:$0xf]
        %v249 = vld [vmem:[%s1 + $0x8] sm:$0xf]
        %v250 = vld [vmem:[%s2] sm:$0xff]
        %v251 = vld [vmem:[%s2 + $0x8] sm:$0xff]
        %v252 = vld [vmem:[%s2 + $0x10] sm:$0xff]
        %254 = vset.pattern.permute.xlu0 0
        %255 = vperm.xlu0 %254, %v250
        %v256 = vpop.permute.xlu0 %255
        %259 = vset.pattern.permute.xlu0 0
        %260 = vperm.xlu0 %259, %v251
        %v261 = vpop.permute.xlu0 %260
        %264 = vset.pattern.permute.xlu0 0
        %265 = vperm.xlu0 %264, %v252
        %v266 = vpop.permute.xlu0 %265
        %v271 = vunpack.c.l.b16 %v247
        %v272 = vunpack.c.l.b16 %v248
        %v273 = vunpack.c.l.b16 %v249
        %v274 = vpack.c.b16 %v272, %v271
        %v275 = vpack.c.b16 %v273, %v273
        %v279 = vunpack.c.l.b16 %v244
        %v280 = vunpack.c.h.b16 %v244
        %v281 = vunpack.c.l.b16 %v245
        %v282 = vunpack.c.h.b16 %v245
        %v283 = vunpack.c.l.b16 %v246
        %v284 = vunpack.c.h.b16 %v246
        %v285 = vpack.c.b16 %v281, %v279
        %v286 = vpack.c.b16 %v282, %v280
        %v287 = vpack.c.b16 %v283, %v283
        %v288 = vpack.c.b16 %v284, %v284
        %vm291 = vcmask 195584
        %v293 = vsel %vm291, %v274, 0
        %v296 = vsel %vm291, %v275, 0
        %vm298 = vcmask 1043456
        %v300 = vsel %vm298, %v287, 0
        %v303 = vsel %vm298, %v288, 0
        %305 = vmatprep.subr.bf16.mxu0 %v286
        %306 = vmatpush1.bf16.msra.mxu0 %v285
        %307 = vmatprep.subr.bf16.mxu0 %v303
        %308 = vmatpush1.bf16.msra.mxu0 %v300
        %309 = vmatprep.subr.bf16.mxu0 0
        %310 = vmatpush1.bf16.msra.mxu0 0
        %311 = vmatprep.subr.bf16.mxu0 0
        %312 = vmatpush1.bf16.msra.mxu0 0
        %313 = vmatprep.subr.bf16.mxu0 0
        %314 = vmatpush1.bf16.msra.mxu0 0
        %315 = vmatprep.subr.bf16.mxu0 0
        %316 = vmatpush1.bf16.msra.mxu0 0
        %317 = vmatprep.subr.bf16.mxu0 0
        %318 = vmatpush1.bf16.msra.mxu0 0
        %319 = vmatprep.subr.bf16.mxu0 0
        %320 = vmatpush1.bf16.msra.mxu0 0
        %321 = vmatprep.subr.bf16.mxu0 0
        %322 = vmatpush1.bf16.msra.mxu0 0
        %323 = vmatprep.subr.bf16.mxu0 0
        %324 = vmatpush1.bf16.msra.mxu0 0
        %325 = vmatprep.subr.bf16.mxu0 0
        %326 = vmatpush1.bf16.msra.mxu0 0
        %327 = vmatprep.subr.bf16.mxu0 0
        %328 = vmatpush1.bf16.msra.mxu0 0
        %329 = vmatprep.subr.bf16.mxu0 0
        %330 = vmatpush1.bf16.msra.mxu0 0
        %331 = vmatprep.subr.bf16.mxu0 0
        %332 = vmatpush1.bf16.msra.mxu0 0
        %333 = vmatprep.subr.bf16.mxu0 0
        %334 = vmatpush1.bf16.msra.mxu0 0
        %335 = vmatprep.subr.bf16.mxu0 0
        %336 = vmatpush1.bf16.msra.mxu0 0
        %337 = vmatprep.mubr.bf16.mxu0 0
        %338 = vmatmul.mubr.bf16.gmra.mrb[0].mxu0 %v293
        %v339 = vpop.f32.mrb[0].mxu0
        %v340 = vadd.f32 %v256, %v339
        %v341 = vpop.f32.mrb[0].mxu0
        %v342 = vadd.f32 %v256, %v341
        %v343 = vpop.f32.mrb[0].mxu0
        %v344 = vadd.f32 %v261, %v343
        %v345 = vpop.f32.mrb[0].mxu0
        %v346 = vadd.f32 %v261, %v345
        %347 = vmatprep.mubr.bf16.mxu0 0
        %348 = vmatmul.mubr.bf16.gmra.mrb[0].mxu0 %v296
        %v349 = vpop.f32.mrb[0].mxu0
        %v350 = vadd.f32 %v266, %v349
        %v351 = vpop.f32.mrb[0].mxu0
        %v352 = vadd.f32 %v266, %v351
        %v353 = vpop.f32.mrb[0].mxu0
        %v354 = vpop.f32.mrb[0].mxu0
        %355 = vdwg.mxu0
        %v356 = vpack.c.bf16 %v340, %v340
        %v357 = vpack.c.bf16 %v342, %v342
        %v360 = vcombine.low %v356, %v357
        %v362 = vunpack.c.l.s4 1983009808
        %v363 = vunpack.c.0.s8 %v362
        %v364 = vlaneseq
        %v365 = vshrl.u32 %v364, 7
        %v366 = vsub.s32 %v363, %v365
        %v367 = vrot.slane %v360, %v366
        %v368 = vcombine.high %v367, %v367
        %v369 = vpack.c.bf16 %v344, %v344
        %v370 = vpack.c.bf16 %v346, %v346
        %v373 = vcombine.low %v369, %v370
        %v375 = vunpack.c.l.s4 1983009808
        %v376 = vunpack.c.0.s8 %v375
        %v377 = vlaneseq
        %v378 = vshrl.u32 %v377, 7
        %v379 = vsub.s32 %v376, %v378
        %v380 = vrot.slane %v373, %v379
        %v381 = vcombine.high %v380, %v380
        %v382 = vpack.c.bf16 %v350, %v350
        %v383 = vpack.c.bf16 %v352, %v352
        %v386 = vcombine.low %v382, %v383
        %v388 = vunpack.c.l.s4 1983009808
        %v389 = vunpack.c.0.s8 %v388
        %v390 = vlaneseq
        %v391 = vshrl.u32 %v390, 7
        %v392 = vsub.s32 %v389, %v391
        %v393 = vrot.slane %v386, %v392
        %v394 = vcombine.high %v393, %v393
        %v396 = vunpack.c.l.s4 1983009808
        %v397 = vunpack.c.0.s8 %v396
        %v398 = vlaneseq
        %v399 = vshrl.u32 %v398, 7
        %v400 = vsub.s32 %v397, %v399
        %v401 = vrot.slane %v380, %v400
        %v402 = vcombine.high %v401, %v401
        %405 = vxpose.xlu0.c.b16.start [1/8] %v401, 128
        %406 = vxpose.xlu0.c.b16.cont [2/8] 0, 128
        %407 = vxpose.xlu0.c.b16.cont [3/8] 0, 128
        %408 = vxpose.xlu0.c.b16.cont [4/8] 0, 128
        %409 = vxpose.xlu0.c.b16.cont [5/8] 0, 128
        %410 = vxpose.xlu0.c.b16.cont [6/8] 0, 128
        %411 = vxpose.xlu0.c.b16.cont [7/8] 0, 128
        %412 = vxpose.xlu0.c.b16.end [8/8] 0, 128
        %v413 = vpop.trf.xlu0
        %v414 = vpop.trf.xlu0
        %v415 = vpop.trf.xlu0
        %v416 = vpop.trf.xlu0
        %v417 = vpop.trf.xlu0
        %v418 = vpop.trf.xlu0
        %v419 = vpop.trf.xlu0
        %v420 = vpop.trf.xlu0
        %421 = vxpose.xlu0.c.b16.start [1/8] %v402, 128
        %422 = vxpose.xlu0.c.b16.cont [2/8] 0, 128
        %423 = vxpose.xlu0.c.b16.cont [3/8] 0, 128
        %424 = vxpose.xlu0.c.b16.cont [4/8] 0, 128
        %425 = vxpose.xlu0.c.b16.cont [5/8] 0, 128
        %426 = vxpose.xlu0.c.b16.cont [6/8] 0, 128
        %427 = vxpose.xlu0.c.b16.cont [7/8] 0, 128
        %428 = vxpose.xlu0.c.b16.end [8/8] 0, 128
        %v429 = vpop.trf.xlu0
        %v430 = vpop.trf.xlu0
        %v431 = vpop.trf.xlu0
        %v432 = vpop.trf.xlu0
        %v433 = vpop.trf.xlu0
        %v434 = vpop.trf.xlu0
        %v435 = vpop.trf.xlu0
        %v436 = vpop.trf.xlu0
        %v438 = vunpack.c.l.s4 1983009808
        %v439 = vunpack.c.0.s8 %v438
        %v440 = vlaneseq
        %v441 = vshrl.u32 %v440, 7
        %v442 = vsub.s32 %v439, %v441
        %v443 = vrot.slane %v367, %v442
        %v444 = vcombine.high %v443, %v443
        %vm445 = vcmask 31744
        %v447 = vsel %vm445, %v413, 0
        %v450 = vsel %vm445, %v414, 0
        %v453 = vsel %vm445, %v415, 0
        %v456 = vsel %vm445, %v416, 0
        %v459 = vsel %vm445, %v417, 0
        %v462 = vsel %vm445, %v418, 0
        %v465 = vsel %vm445, %v419, 0
        %v468 = vsel %vm445, %v420, 0
        %v471 = vsel %vm445, %v429, 0
        %v474 = vsel %vm445, %v430, 0
        %v477 = vsel %vm445, %v431, 0
        %v480 = vsel %vm445, %v432, 0
        %v483 = vsel %vm445, %v433, 0
        %v486 = vsel %vm445, %v434, 0
        %v489 = vsel %vm445, %v435, 0
        %v492 = vsel %vm445, %v436, 0
        %vm494 = vcmask 1041408
        %v496 = vsel %vm494, %v443, 0
        %v499 = vsel %vm494, %v444, 0
        %501 = vmatprep.subr.bf16.mxu0 %v499
        %502 = vmatpush1.bf16.msra.mxu0 %v496
        %503 = vmatprep.subr.bf16.mxu0 0
        %504 = vmatpush1.bf16.msra.mxu0 0
        %505 = vmatprep.subr.bf16.mxu0 0
        %506 = vmatpush1.bf16.msra.mxu0 0
        %507 = vmatprep.subr.bf16.mxu0 0
        %508 = vmatpush1.bf16.msra.mxu0 0
        %509 = vmatprep.subr.bf16.mxu0 0
        %510 = vmatpush1.bf16.msra.mxu0 0
        %511 = vmatprep.subr.bf16.mxu0 0
        %512 = vmatpush1.bf16.msra.mxu0 0
        %513 = vmatprep.subr.bf16.mxu0 0
        %514 = vmatpush1.bf16.msra.mxu0 0
        %515 = vmatprep.subr.bf16.mxu0 0
        %516 = vmatpush1.bf16.msra.mxu0 0
        %517 = vmatprep.subr.bf16.mxu0 0
        %518 = vmatpush1.bf16.msra.mxu0 0
        %519 = vmatprep.subr.bf16.mxu0 0
        %520 = vmatpush1.bf16.msra.mxu0 0
        %521 = vmatprep.subr.bf16.mxu0 0
        %522 = vmatpush1.bf16.msra.mxu0 0
        %523 = vmatprep.subr.bf16.mxu0 0
        %524 = vmatpush1.bf16.msra.mxu0 0
        %525 = vmatprep.subr.bf16.mxu0 0
        %526 = vmatpush1.bf16.msra.mxu0 0
        %527 = vmatprep.subr.bf16.mxu0 0
        %528 = vmatpush1.bf16.msra.mxu0 0
        %529 = vmatprep.subr.bf16.mxu0 0
        %530 = vmatpush1.bf16.msra.mxu0 0
        %531 = vmatprep.subr.bf16.mxu0 0
        %532 = vmatpush1.bf16.msra.mxu0 0
        %533 = vmatprep.mubr.bf16.mxu0 0
        %534 = vmatmul.mubr.bf16.gmra.mrb[0].mxu0 %v447
        %v535 = vpop.f32.mrb[0].mxu0
        %v536 = vadd.f32 0.0, %v535
        %v537 = vpop.f32.mrb[0].mxu0
        %v538 = vadd.f32 0.0, %v537
        %v539 = vpop.f32.mrb[0].mxu0
        %v540 = vadd.f32 0.0, %v539
        %v541 = vpop.f32.mrb[0].mxu0
        %v542 = vadd.f32 0.0, %v541
        %543 = vmatprep.mubr.bf16.mxu0 0
        %544 = vmatmul.mubr.bf16.gmra.mrb[0].mxu0 %v450
        %v545 = vpop.f32.mrb[0].mxu0
        %v546 = vadd.f32 0.0, %v545
        %v547 = vpop.f32.mrb[0].mxu0
        %v548 = vadd.f32 0.0, %v547
        %v549 = vpop.f32.mrb[0].mxu0
        %v550 = vadd.f32 0.0, %v549
        %v551 = vpop.f32.mrb[0].mxu0
        %v552 = vadd.f32 0.0, %v551
        %553 = vmatprep.mubr.bf16.mxu0 0
        %554 = vmatmul.mubr.bf16.gmra.mrb[0].mxu0 %v453
        %v555 = vpop.f32.mrb[0].mxu0
        %v556 = vadd.f32 0.0, %v555
        %v557 = vpop.f32.mrb[0].mxu0
        %v558 = vadd.f32 0.0, %v557
        %v559 = vpop.f32.mrb[0].mxu0
        %v560 = vadd.f32 0.0, %v559
        %v561 = vpop.f32.mrb[0].mxu0
        %v562 = vadd.f32 0.0, %v561
        %563 = vmatprep.mubr.bf16.mxu0 0
        %564 = vmatmul.mubr.bf16.gmra.mrb[0].mxu0 %v456
        %v565 = vpop.f32.mrb[0].mxu0
        %v566 = vadd.f32 0.0, %v565
        %v567 = vpop.f32.mrb[0].mxu0
        %v568 = vadd.f32 0.0, %v567
        %v569 = vpop.f32.mrb[0].mxu0
        %v570 = vadd.f32 0.0, %v569
        %v571 = vpop.f32.mrb[0].mxu0
        %v572 = vadd.f32 0.0, %v571
        %573 = vmatprep.mubr.bf16.mxu0 0
        %574 = vmatmul.mubr.bf16.gmra.mrb[0].mxu0 %v459
        %v575 = vpop.f32.mrb[0].mxu0
        %v576 = vadd.f32 0.0, %v575
        %v577 = vpop.f32.mrb[0].mxu0
        %v578 = vadd.f32 0.0, %v577
        %v579 = vpop.f32.mrb[0].mxu0
        %v580 = vadd.f32 0.0, %v579
        %v581 = vpop.f32.mrb[0].mxu0
        %v582 = vadd.f32 0.0, %v581
        %583 = vmatprep.mubr.bf16.mxu0 0
        %584 = vmatmul.mubr.bf16.gmra.mrb[0].mxu0 %v462
        %v585 = vpop.f32.mrb[0].mxu0
        %v586 = vadd.f32 0.0, %v585
        %v587 = vpop.f32.mrb[0].mxu0
        %v588 = vadd.f32 0.0, %v587
        %v589 = vpop.f32.mrb[0].mxu0
        %v590 = vadd.f32 0.0, %v589
        %v591 = vpop.f32.mrb[0].mxu0
        %v592 = vadd.f32 0.0, %v591
        %593 = vmatprep.mubr.bf16.mxu0 0
        %594 = vmatmul.mubr.bf16.gmra.mrb[0].mxu0 %v465
        %v595 = vpop.f32.mrb[0].mxu0
        %v596 = vadd.f32 0.0, %v595
        %v597 = vpop.f32.mrb[0].mxu0
        %v598 = vadd.f32 0.0, %v597
        %v599 = vpop.f32.mrb[0].mxu0
        %v600 = vadd.f32 0.0, %v599
        %v601 = vpop.f32.mrb[0].mxu0
        %v602 = vadd.f32 0.0, %v601
        %603 = vmatprep.mubr.bf16.mxu0 0
        %604 = vmatmul.mubr.bf16.gmra.mrb[0].mxu0 %v468
        %v605 = vpop.f32.mrb[0].mxu0
        %v606 = vadd.f32 0.0, %v605
        %v607 = vpop.f32.mrb[0].mxu0
        %v608 = vadd.f32 0.0, %v607
        %v609 = vpop.f32.mrb[0].mxu0
        %v610 = vadd.f32 0.0, %v609
        %v611 = vpop.f32.mrb[0].mxu0
        %v612 = vadd.f32 0.0, %v611
        %613 = vmatprep.mubr.bf16.mxu0 0
        %614 = vmatmul.mubr.bf16.gmra.mrb[0].mxu0 %v471
        %v615 = vpop.f32.mrb[0].mxu0
        %v616 = vadd.f32 0.0, %v615
        %v617 = vpop.f32.mrb[0].mxu0
        %v618 = vadd.f32 0.0, %v617
        %v619 = vpop.f32.mrb[0].mxu0
        %v620 = vadd.f32 0.0, %v619
        %v621 = vpop.f32.mrb[0].mxu0
        %v622 = vadd.f32 0.0, %v621
        %623 = vmatprep.mubr.bf16.mxu0 0
        %624 = vmatmul.mubr.bf16.gmra.mrb[0].mxu0 %v474
        %v625 = vpop.f32.mrb[0].mxu0
        %v626 = vadd.f32 0.0, %v625
        %v627 = vpop.f32.mrb[0].mxu0
        %v628 = vadd.f32 0.0, %v627
        %v629 = vpop.f32.mrb[0].mxu0
        %v630 = vadd.f32 0.0, %v629
        %v631 = vpop.f32.mrb[0].mxu0
        %v632 = vadd.f32 0.0, %v631
        %633 = vmatprep.mubr.bf16.mxu0 0
        %634 = vmatmul.mubr.bf16.gmra.mrb[0].mxu0 %v477
        %v635 = vpop.f32.mrb[0].mxu0
        %v636 = vadd.f32 0.0, %v635
        %v637 = vpop.f32.mrb[0].mxu0
        %v638 = vadd.f32 0.0, %v637
        %v639 = vpop.f32.mrb[0].mxu0
        %v640 = vadd.f32 0.0, %v639
        %v641 = vpop.f32.mrb[0].mxu0
        %v642 = vadd.f32 0.0, %v641
        %643 = vmatprep.mubr.bf16.mxu0 0
        %644 = vmatmul.mubr.bf16.gmra.mrb[0].mxu0 %v480
        %v645 = vpop.f32.mrb[0].mxu0
        %v646 = vadd.f32 0.0, %v645
        %v647 = vpop.f32.mrb[0].mxu0
        %v648 = vadd.f32 0.0, %v647
        %v649 = vpop.f32.mrb[0].mxu0
        %v650 = vadd.f32 0.0, %v649
        %v651 = vpop.f32.mrb[0].mxu0
        %v652 = vadd.f32 0.0, %v651
        %653 = vmatprep.mubr.bf16.mxu0 0
        %654 = vmatmul.mubr.bf16.gmra.mrb[0].mxu0 %v483
        %v655 = vpop.f32.mrb[0].mxu0
        %v656 = vadd.f32 0.0, %v655
        %v657 = vpop.f32.mrb[0].mxu0
        %v658 = vadd.f32 0.0, %v657
        %v659 = vpop.f32.mrb[0].mxu0
        %v660 = vadd.f32 0.0, %v659
        %v661 = vpop.f32.mrb[0].mxu0
        %v662 = vadd.f32 0.0, %v661
        %663 = vmatprep.mubr.bf16.mxu0 0
        %664 = vmatmul.mubr.bf16.gmra.mrb[0].mxu0 %v486
        %v665 = vpop.f32.mrb[0].mxu0
        %v666 = vadd.f32 0.0, %v665
        %v667 = vpop.f32.mrb[0].mxu0
        %v668 = vadd.f32 0.0, %v667
        %v669 = vpop.f32.mrb[0].mxu0
        %v670 = vadd.f32 0.0, %v669
        %v671 = vpop.f32.mrb[0].mxu0
        %v672 = vadd.f32 0.0, %v671
        %673 = vmatprep.mubr.bf16.mxu0 0
        %674 = vmatmul.mubr.bf16.gmra.mrb[0].mxu0 %v489
        %v675 = vpop.f32.mrb[0].mxu0
        %v676 = vadd.f32 0.0, %v675
        %v677 = vpop.f32.mrb[0].mxu0
        %v678 = vadd.f32 0.0, %v677
        %v679 = vpop.f32.mrb[0].mxu0
        %v680 = vadd.f32 0.0, %v679
        %v681 = vpop.f32.mrb[0].mxu0
        %v682 = vadd.f32 0.0, %v681
        %683 = vmatprep.mubr.bf16.mxu0 0
        %684 = vmatmul.mubr.bf16.gmra.mrb[0].mxu0 %v492
        %v685 = vpop.f32.mrb[0].mxu0
        %v686 = vadd.f32 0.0, %v685
        %v687 = vpop.f32.mrb[0].mxu0
        %v688 = vadd.f32 0.0, %v687
        %v689 = vpop.f32.mrb[0].mxu0
        %v690 = vadd.f32 0.0, %v689
        %v691 = vpop.f32.mrb[0].mxu0
        %v692 = vadd.f32 0.0, %v691
        %693 = vdwg.mxu0
        %v695 = vunpack.c.l.s4 1983009808
        %v696 = vunpack.c.0.s8 %v695
        %v697 = vlaneseq
        %v698 = vshrl.u32 %v697, 7
        %v699 = vsub.s32 %v696, %v698
        %v700 = vrot.slane %v381, %v699
        %v701 = vcombine.high %v700, %v700
        %704 = vxpose.xlu0.c.b16.start [1/8] %v700, 128
        %705 = vxpose.xlu0.c.b16.cont [2/8] 0, 128
        %706 = vxpose.xlu0.c.b16.cont [3/8] 0, 128
        %707 = vxpose.xlu0.c.b16.cont [4/8] 0, 128
        %708 = vxpose.xlu0.c.b16.cont [5/8] 0, 128
        %709 = vxpose.xlu0.c.b16.cont [6/8] 0, 128
        %710 = vxpose.xlu0.c.b16.cont [7/8] 0, 128
        %711 = vxpose.xlu0.c.b16.end [8/8] 0, 128
        %v712 = vpop.trf.xlu0
        %v713 = vpop.trf.xlu0
        %v714 = vpop.trf.xlu0
        %v715 = vpop.trf.xlu0
        %v716 = vpop.trf.xlu0
        %v717 = vpop.trf.xlu0
        %v718 = vpop.trf.xlu0
        %v719 = vpop.trf.xlu0
        %720 = vxpose.xlu0.c.b16.start [1/8] %v701, 128
        %721 = vxpose.xlu0.c.b16.cont [2/8] 0, 128
        %722 = vxpose.xlu0.c.b16.cont [3/8] 0, 128
        %723 = vxpose.xlu0.c.b16.cont [4/8] 0, 128
        %724 = vxpose.xlu0.c.b16.cont [5/8] 0, 128
        %725 = vxpose.xlu0.c.b16.cont [6/8] 0, 128
        %726 = vxpose.xlu0.c.b16.cont [7/8] 0, 128
        %727 = vxpose.xlu0.c.b16.end [8/8] 0, 128
        %v728 = vpop.trf.xlu0
        %v729 = vpop.trf.xlu0
        %v730 = vpop.trf.xlu0
        %v731 = vpop.trf.xlu0
        %v732 = vpop.trf.xlu0
        %v733 = vpop.trf.xlu0
        %v734 = vpop.trf.xlu0
        %v735 = vpop.trf.xlu0
        %v737 = vunpack.c.l.s4 1983009808
        %v738 = vunpack.c.0.s8 %v737
        %v739 = vlaneseq
        %v740 = vshrl.u32 %v739, 7
        %v741 = vsub.s32 %v738, %v740
        %v742 = vrot.slane %v368, %v741
        %v743 = vcombine.high %v742, %v742
        %v745 = vsel %vm445, %v712, 0
        %v748 = vsel %vm445, %v713, 0
        %v751 = vsel %vm445, %v714, 0
        %v754 = vsel %vm445, %v715, 0
        %v757 = vsel %vm445, %v716, 0
        %v760 = vsel %vm445, %v717, 0
        %v763 = vsel %vm445, %v718, 0
        %v766 = vsel %vm445, %v719, 0
        %v769 = vsel %vm445, %v728, 0
        %v772 = vsel %vm445, %v729, 0
        %v775 = vsel %vm445, %v730, 0
        %v778 = vsel %vm445, %v731, 0
        %v781 = vsel %vm445, %v732, 0
        %v784 = vsel %vm445, %v733, 0
        %v787 = vsel %vm445, %v734, 0
        %v790 = vsel %vm445, %v735, 0
        %v793 = vsel %vm494, %v742, 0
        %v796 = vsel %vm494, %v743, 0
        %798 = vmatprep.subr.bf16.mxu0 %v796
        %799 = vmatpush1.bf16.msra.mxu0 %v793
        %800 = vmatprep.subr.bf16.mxu0 0
        %801 = vmatpush1.bf16.msra.mxu0 0
        %802 = vmatprep.subr.bf16.mxu0 0
        %803 = vmatpush1.bf16.msra.mxu0 0
        %804 = vmatprep.subr.bf16.mxu0 0
        %805 = vmatpush1.bf16.msra.mxu0 0
        %806 = vmatprep.subr.bf16.mxu0 0
        %807 = vmatpush1.bf16.msra.mxu0 0
        %808 = vmatprep.subr.bf16.mxu0 0
        %809 = vmatpush1.bf16.msra.mxu0 0
        %810 = vmatprep.subr.bf16.mxu0 0
        %811 = vmatpush1.bf16.msra.mxu0 0
        %812 = vmatprep.subr.bf16.mxu0 0
        %813 = vmatpush1.bf16.msra.mxu0 0
        %814 = vmatprep.subr.bf16.mxu0 0
        %815 = vmatpush1.bf16.msra.mxu0 0
        %816 = vmatprep.subr.bf16.mxu0 0
        %817 = vmatpush1.bf16.msra.mxu0 0
        %818 = vmatprep.subr.bf16.mxu0 0
        %819 = vmatpush1.bf16.msra.mxu0 0
        %820 = vmatprep.subr.bf16.mxu0 0
        %821 = vmatpush1.bf16.msra.mxu0 0
        %822 = vmatprep.subr.bf16.mxu0 0
        %823 = vmatpush1.bf16.msra.mxu0 0
        %824 = vmatprep.subr.bf16.mxu0 0
        %825 = vmatpush1.bf16.msra.mxu0 0
        %826 = vmatprep.subr.bf16.mxu0 0
        %827 = vmatpush1.bf16.msra.mxu0 0
        %828 = vmatprep.subr.bf16.mxu0 0
        %829 = vmatpush1.bf16.msra.mxu0 0
        %830 = vmatprep.mubr.bf16.mxu0 0
        %831 = vmatmul.mubr.bf16.gmra.mrb[0].mxu0 %v745
        %v832 = vpop.f32.mrb[0].mxu0
        %v833 = vadd.f32 0.0, %v832
        %v834 = vpop.f32.mrb[0].mxu0
        %v835 = vadd.f32 0.0, %v834
        %v836 = vpop.f32.mrb[0].mxu0
        %v837 = vadd.f32 0.0, %v836
        %v838 = vpop.f32.mrb[0].mxu0
        %v839 = vadd.f32 0.0, %v838
        %840 = vmatprep.mubr.bf16.mxu0 0
        %841 = vmatmul.mubr.bf16.gmra.mrb[0].mxu0 %v748
        %v842 = vpop.f32.mrb[0].mxu0
        %v843 = vadd.f32 0.0, %v842
        %v844 = vpop.f32.mrb[0].mxu0
        %v845 = vadd.f32 0.0, %v844
        %v846 = vpop.f32.mrb[0].mxu0
        %v847 = vadd.f32 0.0, %v846
        %v848 = vpop.f32.mrb[0].mxu0
        %v849 = vadd.f32 0.0, %v848
        %850 = vmatprep.mubr.bf16.mxu0 0
        %851 = vmatmul.mubr.bf16.gmra.mrb[0].mxu0 %v751
        %v852 = vpop.f32.mrb[0].mxu0
        %v853 = vadd.f32 0.0, %v852
        %v854 = vpop.f32.mrb[0].mxu0
        %v855 = vadd.f32 0.0, %v854
        %v856 = vpop.f32.mrb[0].mxu0
        %v857 = vadd.f32 0.0, %v856
        %v858 = vpop.f32.mrb[0].mxu0
        %v859 = vadd.f32 0.0, %v858
        %860 = vmatprep.mubr.bf16.mxu0 0
        %861 = vmatmul.mubr.bf16.gmra.mrb[0].mxu0 %v754
        %v862 = vpop.f32.mrb[0].mxu0
        %v863 = vadd.f32 0.0, %v862
        %v864 = vpop.f32.mrb[0].mxu0
        %v865 = vadd.f32 0.0, %v864
        %v866 = vpop.f32.mrb[0].mxu0
        %v867 = vadd.f32 0.0, %v866
        %v868 = vpop.f32.mrb[0].mxu0
        %v869 = vadd.f32 0.0, %v868
        %870 = vmatprep.mubr.bf16.mxu0 0
        %871 = vmatmul.mubr.bf16.gmra.mrb[0].mxu0 %v757
        %v872 = vpop.f32.mrb[0].mxu0
        %v873 = vadd.f32 0.0, %v872
        %v874 = vpop.f32.mrb[0].mxu0
        %v875 = vadd.f32 0.0, %v874
        %v876 = vpop.f32.mrb[0].mxu0
        %v877 = vadd.f32 0.0, %v876
        %v878 = vpop.f32.mrb[0].mxu0
        %v879 = vadd.f32 0.0, %v878
        %880 = vmatprep.mubr.bf16.mxu0 0
        %881 = vmatmul.mubr.bf16.gmra.mrb[0].mxu0 %v760
        %v882 = vpop.f32.mrb[0].mxu0
        %v883 = vadd.f32 0.0, %v882
        %v884 = vpop.f32.mrb[0].mxu0
        %v885 = vadd.f32 0.0, %v884
        %v886 = vpop.f32.mrb[0].mxu0
        %v887 = vadd.f32 0.0, %v886
        %v888 = vpop.f32.mrb[0].mxu0
        %v889 = vadd.f32 0.0, %v888
        %890 = vmatprep.mubr.bf16.mxu0 0
        %891 = vmatmul.mubr.bf16.gmra.mrb[0].mxu0 %v763
        %v892 = vpop.f32.mrb[0].mxu0
        %v893 = vadd.f32 0.0, %v892
        %v894 = vpop.f32.mrb[0].mxu0
        %v895 = vadd.f32 0.0, %v894
        %v896 = vpop.f32.mrb[0].mxu0
        %v897 = vadd.f32 0.0, %v896
        %v898 = vpop.f32.mrb[0].mxu0
        %v899 = vadd.f32 0.0, %v898
        %900 = vmatprep.mubr.bf16.mxu0 0
        %901 = vmatmul.mubr.bf16.gmra.mrb[0].mxu0 %v766
        %v902 = vpop.f32.mrb[0].mxu0
        %v903 = vadd.f32 0.0, %v902
        %v904 = vpop.f32.mrb[0].mxu0
        %v905 = vadd.f32 0.0, %v904
        %v906 = vpop.f32.mrb[0].mxu0
        %v907 = vadd.f32 0.0, %v906
        %v908 = vpop.f32.mrb[0].mxu0
        %v909 = vadd.f32 0.0, %v908
        %910 = vmatprep.mubr.bf16.mxu0 0
        %911 = vmatmul.mubr.bf16.gmra.mrb[0].mxu0 %v769
        %v912 = vpop.f32.mrb[0].mxu0
        %v913 = vadd.f32 0.0, %v912
        %v914 = vpop.f32.mrb[0].mxu0
        %v915 = vadd.f32 0.0, %v914
        %v916 = vpop.f32.mrb[0].mxu0
        %v917 = vadd.f32 0.0, %v916
        %v918 = vpop.f32.mrb[0].mxu0
        %v919 = vadd.f32 0.0, %v918
        %920 = vmatprep.mubr.bf16.mxu0 0
        %921 = vmatmul.mubr.bf16.gmra.mrb[0].mxu0 %v772
        %v922 = vpop.f32.mrb[0].mxu0
        %v923 = vadd.f32 0.0, %v922
        %v924 = vpop.f32.mrb[0].mxu0
        %v925 = vadd.f32 0.0, %v924
        %v926 = vpop.f32.mrb[0].mxu0
        %v927 = vadd.f32 0.0, %v926
        %v928 = vpop.f32.mrb[0].mxu0
        %v929 = vadd.f32 0.0, %v928
        %930 = vmatprep.mubr.bf16.mxu0 0
        %931 = vmatmul.mubr.bf16.gmra.mrb[0].mxu0 %v775
        %v932 = vpop.f32.mrb[0].mxu0
        %v933 = vadd.f32 0.0, %v932
        %v934 = vpop.f32.mrb[0].mxu0
        %v935 = vadd.f32 0.0, %v934
        %v936 = vpop.f32.mrb[0].mxu0
        %v937 = vadd.f32 0.0, %v936
        %v938 = vpop.f32.mrb[0].mxu0
        %v939 = vadd.f32 0.0, %v938
        %940 = vmatprep.mubr.bf16.mxu0 0
        %941 = vmatmul.mubr.bf16.gmra.mrb[0].mxu0 %v778
        %v942 = vpop.f32.mrb[0].mxu0
        %v943 = vadd.f32 0.0, %v942
        %v944 = vpop.f32.mrb[0].mxu0
        %v945 = vadd.f32 0.0, %v944
        %v946 = vpop.f32.mrb[0].mxu0
        %v947 = vadd.f32 0.0, %v946
        %v948 = vpop.f32.mrb[0].mxu0
        %v949 = vadd.f32 0.0, %v948
        %950 = vmatprep.mubr.bf16.mxu0 0
        %951 = vmatmul.mubr.bf16.gmra.mrb[0].mxu0 %v781
        %v952 = vpop.f32.mrb[0].mxu0
        %v953 = vadd.f32 0.0, %v952
        %v954 = vpop.f32.mrb[0].mxu0
        %v955 = vadd.f32 0.0, %v954
        %v956 = vpop.f32.mrb[0].mxu0
        %v957 = vadd.f32 0.0, %v956
        %v958 = vpop.f32.mrb[0].mxu0
        %v959 = vadd.f32 0.0, %v958
        %960 = vmatprep.mubr.bf16.mxu0 0
        %961 = vmatmul.mubr.bf16.gmra.mrb[0].mxu0 %v784
        %v962 = vpop.f32.mrb[0].mxu0
        %v963 = vadd.f32 0.0, %v962
        %v964 = vpop.f32.mrb[0].mxu0
        %v965 = vadd.f32 0.0, %v964
        %v966 = vpop.f32.mrb[0].mxu0
        %v967 = vadd.f32 0.0, %v966
        %v968 = vpop.f32.mrb[0].mxu0
        %v969 = vadd.f32 0.0, %v968
        %970 = vmatprep.mubr.bf16.mxu0 0
        %971 = vmatmul.mubr.bf16.gmra.mrb[0].mxu0 %v787
        %v972 = vpop.f32.mrb[0].mxu0
        %v973 = vadd.f32 0.0, %v972
        %v974 = vpop.f32.mrb[0].mxu0
        %v975 = vadd.f32 0.0, %v974
        %v976 = vpop.f32.mrb[0].mxu0
        %v977 = vadd.f32 0.0, %v976
        %v978 = vpop.f32.mrb[0].mxu0
        %v979 = vadd.f32 0.0, %v978
        %980 = vmatprep.mubr.bf16.mxu0 0
        %981 = vmatmul.mubr.bf16.gmra.mrb[0].mxu0 %v790
        %v982 = vpop.f32.mrb[0].mxu0
        %v983 = vadd.f32 0.0, %v982
        %v984 = vpop.f32.mrb[0].mxu0
        %v985 = vadd.f32 0.0, %v984
        %v986 = vpop.f32.mrb[0].mxu0
        %v987 = vadd.f32 0.0, %v986
        %v988 = vpop.f32.mrb[0].mxu0
        %v989 = vadd.f32 0.0, %v988
        %990 = vdwg.mxu0
        %v991 = vmax.f32 %v536, %v540
        %v992 = vmax.f32 %v991, %v546
        %v993 = vmax.f32 %v992, %v550
        %v994 = vmax.f32 %v993, %v556
        %v995 = vmax.f32 %v994, %v560
        %v996 = vmax.f32 %v995, %v566
        %v997 = vmax.f32 %v996, %v570
        %v998 = vmax.f32 %v997, %v576
        %v999 = vmax.f32 %v998, %v580
        %v1000 = vmax.f32 %v999, %v586
        %v1001 = vmax.f32 %v1000, %v590
        %v1002 = vmax.f32 %v1001, %v596
        %v1003 = vmax.f32 %v1002, %v600
        %v1004 = vmax.f32 %v1003, %v606
        %v1005 = vmax.f32 %v1004, %v610
        %v1006 = vmax.f32 %v1005, %v616
        %v1007 = vmax.f32 %v1006, %v620
        %v1008 = vmax.f32 %v1007, %v626
        %v1009 = vmax.f32 %v1008, %v630
        %v1010 = vmax.f32 %v1009, %v636
        %v1011 = vmax.f32 %v1010, %v640
        %v1012 = vmax.f32 %v1011, %v646
        %v1013 = vmax.f32 %v1012, %v650
        %v1014 = vmax.f32 %v1013, %v656
        %v1015 = vmax.f32 %v1014, %v660
        %v1016 = vmax.f32 %v1015, %v666
        %v1017 = vmax.f32 %v1016, %v670
        %v1018 = vmax.f32 %v1017, %v676
        %v1019 = vmax.f32 %v1018, %v680
        %v1020 = vmax.f32 %v1019, %v686
        %v1021 = vmax.f32 %v1020, %v690
        %v1022 = vrot.slane %v1021, 4
        %v1023 = vmax.f32 %v1021, %v1022
        %v1024 = vrot.slane %v1023, 2
        %v1025 = vmax.f32 %v1023, %v1024
        %v1026 = vrot.slane %v1025, 1
        %v1027 = vmax.f32 %v1025, %v1026
        %v1028 = vmax.f32 %v538, %v542
        %v1029 = vmax.f32 %v1028, %v548
        %v1030 = vmax.f32 %v1029, %v552
        %v1031 = vmax.f32 %v1030, %v558
        %v1032 = vmax.f32 %v1031, %v562
        %v1033 = vmax.f32 %v1032, %v568
        %v1034 = vmax.f32 %v1033, %v572
        %v1035 = vmax.f32 %v1034, %v578
        %v1036 = vmax.f32 %v1035, %v582
        %v1037 = vmax.f32 %v1036, %v588
        %v1038 = vmax.f32 %v1037, %v592
        %v1039 = vmax.f32 %v1038, %v598
        %v1040 = vmax.f32 %v1039, %v602
        %v1041 = vmax.f32 %v1040, %v608
        %v1042 = vmax.f32 %v1041, %v612
        %v1043 = vmax.f32 %v1042, %v618
        %v1044 = vmax.f32 %v1043, %v622
        %v1045 = vmax.f32 %v1044, %v628
        %v1046 = vmax.f32 %v1045, %v632
        %v1047 = vmax.f32 %v1046, %v638
        %v1048 = vmax.f32 %v1047, %v642
        %v1049 = vmax.f32 %v1048, %v648
        %v1050 = vmax.f32 %v1049, %v652
        %v1051 = vmax.f32 %v1050, %v658
        %v1052 = vmax.f32 %v1051, %v662
        %v1053 = vmax.f32 %v1052, %v668
        %v1054 = vmax.f32 %v1053, %v672
        %v1055 = vmax.f32 %v1054, %v678
        %v1056 = vmax.f32 %v1055, %v682
        %v1057 = vmax.f32 %v1056, %v688
        %v1058 = vmax.f32 %v1057, %v692
        %v1059 = vrot.slane %v1058, 4
        %v1060 = vmax.f32 %v1058, %v1059
        %v1061 = vrot.slane %v1060, 2
        %v1062 = vmax.f32 %v1060, %v1061
        %v1063 = vrot.slane %v1062, 1
        %v1064 = vmax.f32 %v1062, %v1063
        %v1065 = vmax.f32 %v833, %v837
        %v1066 = vmax.f32 %v1065, %v843
        %v1067 = vmax.f32 %v1066, %v847
        %v1068 = vmax.f32 %v1067, %v853
        %v1069 = vmax.f32 %v1068, %v857
        %v1070 = vmax.f32 %v1069, %v863
        %v1071 = vmax.f32 %v1070, %v867
        %v1072 = vmax.f32 %v1071, %v873
        %v1073 = vmax.f32 %v1072, %v877
        %v1074 = vmax.f32 %v1073, %v883
        %v1075 = vmax.f32 %v1074, %v887
        %v1076 = vmax.f32 %v1075, %v893
        %v1077 = vmax.f32 %v1076, %v897
        %v1078 = vmax.f32 %v1077, %v903
        %v1079 = vmax.f32 %v1078, %v907
        %v1080 = vmax.f32 %v1079, %v913
        %v1081 = vmax.f32 %v1080, %v917
        %v1082 = vmax.f32 %v1081, %v923
        %v1083 = vmax.f32 %v1082, %v927
        %v1084 = vmax.f32 %v1083, %v933
        %v1085 = vmax.f32 %v1084, %v937
        %v1086 = vmax.f32 %v1085, %v943
        %v1087 = vmax.f32 %v1086, %v947
        %v1088 = vmax.f32 %v1087, %v953
        %v1089 = vmax.f32 %v1088, %v957
        %v1090 = vmax.f32 %v1089, %v963
        %v1091 = vmax.f32 %v1090, %v967
        %v1092 = vmax.f32 %v1091, %v973
        %v1093 = vmax.f32 %v1092, %v977
        %v1094 = vmax.f32 %v1093, %v983
        %v1095 = vmax.f32 %v1094, %v987
        %v1096 = vrot.slane %v1095, 4
        %v1097 = vmax.f32 %v1095, %v1096
        %v1098 = vrot.slane %v1097, 2
        %v1099 = vmax.f32 %v1097, %v1098
        %v1100 = vrot.slane %v1099, 1
        %v1101 = vmax.f32 %v1099, %v1100
        %v1102 = vmax.f32 %v835, %v839
        %v1103 = vmax.f32 %v1102, %v845
        %v1104 = vmax.f32 %v1103, %v849
        %v1105 = vmax.f32 %v1104, %v855
        %v1106 = vmax.f32 %v1105, %v859
        %v1107 = vmax.f32 %v1106, %v865
        %v1108 = vmax.f32 %v1107, %v869
        %v1109 = vmax.f32 %v1108, %v875
        %v1110 = vmax.f32 %v1109, %v879
        %v1111 = vmax.f32 %v1110, %v885
        %v1112 = vmax.f32 %v1111, %v889
        %v1113 = vmax.f32 %v1112, %v895
        %v1114 = vmax.f32 %v1113, %v899
        %v1115 = vmax.f32 %v1114, %v905
        %v1116 = vmax.f32 %v1115, %v909
        %v1117 = vmax.f32 %v1116, %v915
        %v1118 = vmax.f32 %v1117, %v919
        %v1119 = vmax.f32 %v1118, %v925
        %v1120 = vmax.f32 %v1119, %v929
        %v1121 = vmax.f32 %v1120, %v935
        %v1122 = vmax.f32 %v1121, %v939
        %v1123 = vmax.f32 %v1122, %v945
        %v1124 = vmax.f32 %v1123, %v949
        %v1125 = vmax.f32 %v1124, %v955
        %v1126 = vmax.f32 %v1125, %v959
        %v1127 = vmax.f32 %v1126, %v965
        %v1128 = vmax.f32 %v1127, %v969
        %v1129 = vmax.f32 %v1128, %v975
        %v1130 = vmax.f32 %v1129, %v979
        %v1131 = vmax.f32 %v1130, %v985
        %v1132 = vmax.f32 %v1131, %v989
        %v1133 = vrot.slane %v1132, 4
        %v1134 = vmax.f32 %v1132, %v1133
        %v1135 = vrot.slane %v1134, 2
        %v1136 = vmax.f32 %v1134, %v1135
        %v1137 = vrot.slane %v1136, 1
        %v1138 = vmax.f32 %v1136, %v1137
        %v1139 = vsub.f32 %v536, %v1027
        %v1140 = vsub.f32 %v538, %v1064
        %v1141 = vsub.f32 %v540, %v1027
        %v1142 = vsub.f32 %v542, %v1064
        %v1143 = vsub.f32 %v546, %v1027
        %v1144 = vsub.f32 %v548, %v1064
        %v1145 = vsub.f32 %v550, %v1027
        %v1146 = vsub.f32 %v552, %v1064
        %v1147 = vsub.f32 %v556, %v1027
        %v1148 = vsub.f32 %v558, %v1064
        %v1149 = vsub.f32 %v560, %v1027
        %v1150 = vsub.f32 %v562, %v1064
        %v1151 = vsub.f32 %v566, %v1027
        %v1152 = vsub.f32 %v568, %v1064
        %v1153 = vsub.f32 %v570, %v1027
        %v1154 = vsub.f32 %v572, %v1064
        %v1155 = vsub.f32 %v576, %v1027
        %v1156 = vsub.f32 %v578, %v1064
        %v1157 = vsub.f32 %v580, %v1027
        %v1158 = vsub.f32 %v582, %v1064
        %v1159 = vsub.f32 %v586, %v1027
        %v1160 = vsub.f32 %v588, %v1064
        %v1161 = vsub.f32 %v590, %v1027
        %v1162 = vsub.f32 %v592, %v1064
        %v1163 = vsub.f32 %v596, %v1027
        %v1164 = vsub.f32 %v598, %v1064
        %v1165 = vsub.f32 %v600, %v1027
        %v1166 = vsub.f32 %v602, %v1064
        %v1167 = vsub.f32 %v606, %v1027
        %v1168 = vsub.f32 %v608, %v1064
        %v1169 = vsub.f32 %v610, %v1027
        %v1170 = vsub.f32 %v612, %v1064
        %v1171 = vsub.f32 %v616, %v1027
        %v1172 = vsub.f32 %v618, %v1064
        %v1173 = vsub.f32 %v620, %v1027
        %v1174 = vsub.f32 %v622, %v1064
        %v1175 = vsub.f32 %v626, %v1027
        %v1176 = vsub.f32 %v628, %v1064
        %v1177 = vsub.f32 %v630, %v1027
        %v1178 = vsub.f32 %v632, %v1064
        %v1179 = vsub.f32 %v636, %v1027
        %v1180 = vsub.f32 %v638, %v1064
        %v1181 = vsub.f32 %v640, %v1027
        %v1182 = vsub.f32 %v642, %v1064
        %v1183 = vsub.f32 %v646, %v1027
        %v1184 = vsub.f32 %v648, %v1064
        %v1185 = vsub.f32 %v650, %v1027
        %v1186 = vsub.f32 %v652, %v1064
        %v1187 = vsub.f32 %v656, %v1027
        %v1188 = vsub.f32 %v658, %v1064
        %v1189 = vsub.f32 %v660, %v1027
        %v1190 = vsub.f32 %v662, %v1064
        %v1191 = vsub.f32 %v666, %v1027
        %v1192 = vsub.f32 %v668, %v1064
        %v1193 = vsub.f32 %v670, %v1027
        %v1194 = vsub.f32 %v672, %v1064
        %v1195 = vsub.f32 %v676, %v1027
        %v1196 = vsub.f32 %v678, %v1064
        %v1197 = vsub.f32 %v680, %v1027
        %v1198 = vsub.f32 %v682, %v1064
        %v1199 = vsub.f32 %v686, %v1027
        %v1200 = vsub.f32 %v688, %v1064
        %v1201 = vsub.f32 %v690, %v1027
        %v1202 = vsub.f32 %v692, %v1064
        %v1203 = vsub.f32 %v833, %v1101
        %v1204 = vsub.f32 %v835, %v1138
        %v1205 = vsub.f32 %v837, %v1101
        %v1206 = vsub.f32 %v839, %v1138
        %v1207 = vsub.f32 %v843, %v1101
        %v1208 = vsub.f32 %v845, %v1138
        %v1209 = vsub.f32 %v847, %v1101
        %v1210 = vsub.f32 %v849, %v1138
        %v1211 = vsub.f32 %v853, %v1101
        %v1212 = vsub.f32 %v855, %v1138
        %v1213 = vsub.f32 %v857, %v1101
        %v1214 = vsub.f32 %v859, %v1138
        %v1215 = vsub.f32 %v863, %v1101
        %v1216 = vsub.f32 %v865, %v1138
        %v1217 = vsub.f32 %v867, %v1101
        %v1218 = vsub.f32 %v869, %v1138
        %v1219 = vsub.f32 %v873, %v1101
        %v1220 = vsub.f32 %v875, %v1138
        %v1221 = vsub.f32 %v877, %v1101
        %v1222 = vsub.f32 %v879, %v1138
        %v1223 = vsub.f32 %v883, %v1101
        %v1224 = vsub.f32 %v885, %v1138
        %v1225 = vsub.f32 %v887, %v1101
        %v1226 = vsub.f32 %v889, %v1138
        %v1227 = vsub.f32 %v893, %v1101
        %v1228 = vsub.f32 %v895, %v1138
        %v1229 = vsub.f32 %v897, %v1101
        %v1230 = vsub.f32 %v899, %v1138
        %v1231 = vsub.f32 %v903, %v1101
        %v1232 = vsub.f32 %v905, %v1138
        %v1233 = vsub.f32 %v907, %v1101
        %v1234 = vsub.f32 %v909, %v1138
        %v1235 = vsub.f32 %v913, %v1101
        %v1236 = vsub.f32 %v915, %v1138
        %v1237 = vsub.f32 %v917, %v1101
        %v1238 = vsub.f32 %v919, %v1138
        %v1239 = vsub.f32 %v923, %v1101
        %v1240 = vsub.f32 %v925, %v1138
        %v1241 = vsub.f32 %v927, %v1101
        %v1242 = vsub.f32 %v929, %v1138
        %v1243 = vsub.f32 %v933, %v1101
        %v1244 = vsub.f32 %v935, %v1138
        %v1245 = vsub.f32 %v937, %v1101
        %v1246 = vsub.f32 %v939, %v1138
        %v1247 = vsub.f32 %v943, %v1101
        %v1248 = vsub.f32 %v945, %v1138
        %v1249 = vsub.f32 %v947, %v1101
        %v1250 = vsub.f32 %v949, %v1138
        %v1251 = vsub.f32 %v953, %v1101
        %v1252 = vsub.f32 %v955, %v1138
        %v1253 = vsub.f32 %v957, %v1101
        %v1254 = vsub.f32 %v959, %v1138
        %v1255 = vsub.f32 %v963, %v1101
        %v1256 = vsub.f32 %v965, %v1138
        %v1257 = vsub.f32 %v967, %v1101
        %v1258 = vsub.f32 %v969, %v1138
        %v1259 = vsub.f32 %v973, %v1101
        %v1260 = vsub.f32 %v975, %v1138
        %v1261 = vsub.f32 %v977, %v1101
        %v1262 = vsub.f32 %v979, %v1138
        %v1263 = vsub.f32 %v983, %v1101
        %v1264 = vsub.f32 %v985, %v1138
        %v1265 = vsub.f32 %v987, %v1101
        %v1266 = vsub.f32 %v989, %v1138
        %v1267 = vmul.f32 %v1139, 1.442695
        %v1268 = vpow.pop %v1267
        %v1269 = vmul.f32 %v1140, 1.442695
        %v1270 = vpow.pop %v1269
        %v1271 = vmul.f32 %v1141, 1.442695
        %v1272 = vpow.pop %v1271
        %v1273 = vmul.f32 %v1142, 1.442695
        %v1274 = vpow.pop %v1273
        %v1275 = vmul.f32 %v1143, 1.442695
        %v1276 = vpow.pop %v1275
        %v1277 = vmul.f32 %v1144, 1.442695
        %v1278 = vpow.pop %v1277
        %v1279 = vmul.f32 %v1145, 1.442695
        %v1280 = vpow.pop %v1279
        %v1281 = vmul.f32 %v1146, 1.442695
        %v1282 = vpow.pop %v1281
        %v1283 = vmul.f32 %v1147, 1.442695
        %v1284 = vpow.pop %v1283
        %v1285 = vmul.f32 %v1148, 1.442695
        %v1286 = vpow.pop %v1285
        %v1287 = vmul.f32 %v1149, 1.442695
        %v1288 = vpow.pop %v1287
        %v1289 = vmul.f32 %v1150, 1.442695
        %v1290 = vpow.pop %v1289
        %v1291 = vmul.f32 %v1151, 1.442695
        %v1292 = vpow.pop %v1291
        %v1293 = vmul.f32 %v1152, 1.442695
        %v1294 = vpow.pop %v1293
        %v1295 = vmul.f32 %v1153, 1.442695
        %v1296 = vpow.pop %v1295
        %v1297 = vmul.f32 %v1154, 1.442695
        %v1298 = vpow.pop %v1297
        %v1299 = vmul.f32 %v1155, 1.442695
        %v1300 = vpow.pop %v1299
        %v1301 = vmul.f32 %v1156, 1.442695
        %v1302 = vpow.pop %v1301
        %v1303 = vmul.f32 %v1157, 1.442695
        %v1304 = vpow.pop %v1303
        %v1305 = vmul.f32 %v1158, 1.442695
        %v1306 = vpow.pop %v1305
        %v1307 = vmul.f32 %v1159, 1.442695
        %v1308 = vpow.pop %v1307
        %v1309 = vmul.f32 %v1160, 1.442695
        %v1310 = vpow.pop %v1309
        %v1311 = vmul.f32 %v1161, 1.442695
        %v1312 = vpow.pop %v1311
        %v1313 = vmul.f32 %v1162, 1.442695
        %v1314 = vpow.pop %v1313
        %v1315 = vmul.f32 %v1163, 1.442695
        %v1316 = vpow.pop %v1315
        %v1317 = vmul.f32 %v1164, 1.442695
        %v1318 = vpow.pop %v1317
        %v1319 = vmul.f32 %v1165, 1.442695
        %v1320 = vpow.pop %v1319
        %v1321 = vmul.f32 %v1166, 1.442695
        %v1322 = vpow.pop %v1321
        %v1323 = vmul.f32 %v1167, 1.442695
        %v1324 = vpow.pop %v1323
        %v1325 = vmul.f32 %v1168, 1.442695
        %v1326 = vpow.pop %v1325
        %v1327 = vmul.f32 %v1169, 1.442695
        %v1328 = vpow.pop %v1327
        %v1329 = vmul.f32 %v1170, 1.442695
        %v1330 = vpow.pop %v1329
        %v1331 = vmul.f32 %v1171, 1.442695
        %v1332 = vpow.pop %v1331
        %v1333 = vmul.f32 %v1172, 1.442695
        %v1334 = vpow.pop %v1333
        %v1335 = vmul.f32 %v1173, 1.442695
        %v1336 = vpow.pop %v1335
        %v1337 = vmul.f32 %v1174, 1.442695
        %v1338 = vpow.pop %v1337
        %v1339 = vmul.f32 %v1175, 1.442695
        %v1340 = vpow.pop %v1339
        %v1341 = vmul.f32 %v1176, 1.442695
        %v1342 = vpow.pop %v1341
        %v1343 = vmul.f32 %v1177, 1.442695
        %v1344 = vpow.pop %v1343
        %v1345 = vmul.f32 %v1178, 1.442695
        %v1346 = vpow.pop %v1345
        %v1347 = vmul.f32 %v1179, 1.442695
        %v1348 = vpow.pop %v1347
        %v1349 = vmul.f32 %v1180, 1.442695
        %v1350 = vpow.pop %v1349
        %v1351 = vmul.f32 %v1181, 1.442695
        %v1352 = vpow.pop %v1351
        %v1353 = vmul.f32 %v1182, 1.442695
        %v1354 = vpow.pop %v1353
        %v1355 = vmul.f32 %v1183, 1.442695
        %v1356 = vpow.pop %v1355
        %v1357 = vmul.f32 %v1184, 1.442695
        %v1358 = vpow.pop %v1357
        %v1359 = vmul.f32 %v1185, 1.442695
        %v1360 = vpow.pop %v1359
        %v1361 = vmul.f32 %v1186, 1.442695
        %v1362 = vpow.pop %v1361
        %v1363 = vmul.f32 %v1187, 1.442695
        %v1364 = vpow.pop %v1363
        %v1365 = vmul.f32 %v1188, 1.442695
        %v1366 = vpow.pop %v1365
        %v1367 = vmul.f32 %v1189, 1.442695
        %v1368 = vpow.pop %v1367
        %v1369 = vmul.f32 %v1190, 1.442695
        %v1370 = vpow.pop %v1369
        %v1371 = vmul.f32 %v1191, 1.442695
        %v1372 = vpow.pop %v1371
        %v1373 = vmul.f32 %v1192, 1.442695
        %v1374 = vpow.pop %v1373
        %v1375 = vmul.f32 %v1193, 1.442695
        %v1376 = vpow.pop %v1375
        %v1377 = vmul.f32 %v1194, 1.442695
        %v1378 = vpow.pop %v1377
        %v1379 = vmul.f32 %v1195, 1.442695
        %v1380 = vpow.pop %v1379
        %v1381 = vmul.f32 %v1196, 1.442695
        %v1382 = vpow.pop %v1381
        %v1383 = vmul.f32 %v1197, 1.442695
        %v1384 = vpow.pop %v1383
        %v1385 = vmul.f32 %v1198, 1.442695
        %v1386 = vpow.pop %v1385
        %v1387 = vmul.f32 %v1199, 1.442695
        %v1388 = vpow.pop %v1387
        %v1389 = vmul.f32 %v1200, 1.442695
        %v1390 = vpow.pop %v1389
        %v1391 = vmul.f32 %v1201, 1.442695
        %v1392 = vpow.pop %v1391
        %v1393 = vmul.f32 %v1202, 1.442695
        %v1394 = vpow.pop %v1393
        %v1395 = vmul.f32 %v1203, 1.442695
        %v1396 = vpow.pop %v1395
        %v1397 = vmul.f32 %v1204, 1.442695
        %v1398 = vpow.pop %v1397
        %v1399 = vmul.f32 %v1205, 1.442695
        %v1400 = vpow.pop %v1399
        %v1401 = vmul.f32 %v1206, 1.442695
        %v1402 = vpow.pop %v1401
        %v1403 = vmul.f32 %v1207, 1.442695
        %v1404 = vpow.pop %v1403
        %v1405 = vmul.f32 %v1208, 1.442695
        %v1406 = vpow.pop %v1405
        %v1407 = vmul.f32 %v1209, 1.442695
        %v1408 = vpow.pop %v1407
        %v1409 = vmul.f32 %v1210, 1.442695
        %v1410 = vpow.pop %v1409
        %v1411 = vmul.f32 %v1211, 1.442695
        %v1412 = vpow.pop %v1411
        %v1413 = vmul.f32 %v1212, 1.442695
        %v1414 = vpow.pop %v1413
        %v1415 = vmul.f32 %v1213, 1.442695
        %v1416 = vpow.pop %v1415
        %v1417 = vmul.f32 %v1214, 1.442695
        %v1418 = vpow.pop %v1417
        %v1419 = vmul.f32 %v1215, 1.442695
        %v1420 = vpow.pop %v1419
        %v1421 = vmul.f32 %v1216, 1.442695
        %v1422 = vpow.pop %v1421
        %v1423 = vmul.f32 %v1217, 1.442695
        %v1424 = vpow.pop %v1423
        %v1425 = vmul.f32 %v1218, 1.442695
        %v1426 = vpow.pop %v1425
        %v1427 = vmul.f32 %v1219, 1.442695
        %v1428 = vpow.pop %v1427
        %v1429 = vmul.f32 %v1220, 1.442695
        %v1430 = vpow.pop %v1429
        %v1431 = vmul.f32 %v1221, 1.442695
        %v1432 = vpow.pop %v1431
        %v1433 = vmul.f32 %v1222, 1.442695
        %v1434 = vpow.pop %v1433
        %v1435 = vmul.f32 %v1223, 1.442695
        %v1436 = vpow.pop %v1435
        %v1437 = vmul.f32 %v1224, 1.442695
        %v1438 = vpow.pop %v1437
        %v1439 = vmul.f32 %v1225, 1.442695
        %v1440 = vpow.pop %v1439
        %v1441 = vmul.f32 %v1226, 1.442695
        %v1442 = vpow.pop %v1441
        %v1443 = vmul.f32 %v1227, 1.442695
        %v1444 = vpow.pop %v1443
        %v1445 = vmul.f32 %v1228, 1.442695
        %v1446 = vpow.pop %v1445
        %v1447 = vmul.f32 %v1229, 1.442695
        %v1448 = vpow.pop %v1447
        %v1449 = vmul.f32 %v1230, 1.442695
        %v1450 = vpow.pop %v1449
        %v1451 = vmul.f32 %v1231, 1.442695
        %v1452 = vpow.pop %v1451
        %v1453 = vmul.f32 %v1232, 1.442695
        %v1454 = vpow.pop %v1453
        %v1455 = vmul.f32 %v1233, 1.442695
        %v1456 = vpow.pop %v1455
        %v1457 = vmul.f32 %v1234, 1.442695
        %v1458 = vpow.pop %v1457
        %v1459 = vmul.f32 %v1235, 1.442695
        %v1460 = vpow.pop %v1459
        %v1461 = vmul.f32 %v1236, 1.442695
        %v1462 = vpow.pop %v1461
        %v1463 = vmul.f32 %v1237, 1.442695
        %v1464 = vpow.pop %v1463
        %v1465 = vmul.f32 %v1238, 1.442695
        %v1466 = vpow.pop %v1465
        %v1467 = vmul.f32 %v1239, 1.442695
        %v1468 = vpow.pop %v1467
        %v1469 = vmul.f32 %v1240, 1.442695
        %v1470 = vpow.pop %v1469
        %v1471 = vmul.f32 %v1241, 1.442695
        %v1472 = vpow.pop %v1471
        %v1473 = vmul.f32 %v1242, 1.442695
        %v1474 = vpow.pop %v1473
        %v1475 = vmul.f32 %v1243, 1.442695
        %v1476 = vpow.pop %v1475
        %v1477 = vmul.f32 %v1244, 1.442695
        %v1478 = vpow.pop %v1477
        %v1479 = vmul.f32 %v1245, 1.442695
        %v1480 = vpow.pop %v1479
        %v1481 = vmul.f32 %v1246, 1.442695
        %v1482 = vpow.pop %v1481
        %v1483 = vmul.f32 %v1247, 1.442695
        %v1484 = vpow.pop %v1483
        %v1485 = vmul.f32 %v1248, 1.442695
        %v1486 = vpow.pop %v1485
        %v1487 = vmul.f32 %v1249, 1.442695
        %v1488 = vpow.pop %v1487
        %v1489 = vmul.f32 %v1250, 1.442695
        %v1490 = vpow.pop %v1489
        %v1491 = vmul.f32 %v1251, 1.442695
        %v1492 = vpow.pop %v1491
        %v1493 = vmul.f32 %v1252, 1.442695
        %v1494 = vpow.pop %v1493
        %v1495 = vmul.f32 %v1253, 1.442695
        %v1496 = vpow.pop %v1495
        %v1497 = vmul.f32 %v1254, 1.442695
        %v1498 = vpow.pop %v1497
        %v1499 = vmul.f32 %v1255, 1.442695
        %v1500 = vpow.pop %v1499
        %v1501 = vmul.f32 %v1256, 1.442695
        %v1502 = vpow.pop %v1501
        %v1503 = vmul.f32 %v1257, 1.442695
        %v1504 = vpow.pop %v1503
        %v1505 = vmul.f32 %v1258, 1.442695
        %v1506 = vpow.pop %v1505
        %v1507 = vmul.f32 %v1259, 1.442695
        %v1508 = vpow.pop %v1507
        %v1509 = vmul.f32 %v1260, 1.442695
        %v1510 = vpow.pop %v1509
        %v1511 = vmul.f32 %v1261, 1.442695
        %v1512 = vpow.pop %v1511
        %v1513 = vmul.f32 %v1262, 1.442695
        %v1514 = vpow.pop %v1513
        %v1515 = vmul.f32 %v1263, 1.442695
        %v1516 = vpow.pop %v1515
        %v1517 = vmul.f32 %v1264, 1.442695
        %v1518 = vpow.pop %v1517
        %v1519 = vmul.f32 %v1265, 1.442695
        %v1520 = vpow.pop %v1519
        %v1521 = vmul.f32 %v1266, 1.442695
        %v1522 = vpow.pop %v1521
        %v1523 = vadd.f32 %v1268, %v1272
        %v1524 = vadd.f32 %v1523, %v1276
        %v1525 = vadd.f32 %v1524, %v1280
        %v1526 = vadd.f32 %v1525, %v1284
        %v1527 = vadd.f32 %v1526, %v1288
        %v1528 = vadd.f32 %v1527, %v1292
        %v1529 = vadd.f32 %v1528, %v1296
        %v1530 = vadd.f32 %v1529, %v1300
        %v1531 = vadd.f32 %v1530, %v1304
        %v1532 = vadd.f32 %v1531, %v1308
        %v1533 = vadd.f32 %v1532, %v1312
        %v1534 = vadd.f32 %v1533, %v1316
        %v1535 = vadd.f32 %v1534, %v1320
        %v1536 = vadd.f32 %v1535, %v1324
        %v1537 = vadd.f32 %v1536, %v1328
        %v1538 = vadd.f32 %v1537, %v1332
        %v1539 = vadd.f32 %v1538, %v1336
        %v1540 = vadd.f32 %v1539, %v1340
        %v1541 = vadd.f32 %v1540, %v1344
        %v1542 = vadd.f32 %v1541, %v1348
        %v1543 = vadd.f32 %v1542, %v1352
        %v1544 = vadd.f32 %v1543, %v1356
        %v1545 = vadd.f32 %v1544, %v1360
        %v1546 = vadd.f32 %v1545, %v1364
        %v1547 = vadd.f32 %v1546, %v1368
        %v1548 = vadd.f32 %v1547, %v1372
        %v1549 = vadd.f32 %v1548, %v1376
        %v1550 = vadd.f32 %v1549, %v1380
        %v1551 = vadd.f32 %v1550, %v1384
        %v1552 = vadd.f32 %v1551, %v1388
        %v1553 = vadd.f32 %v1552, %v1392
        %v1554 = vrot.slane %v1553, 4
        %v1555 = vadd.f32 %v1553, %v1554
        %v1556 = vrot.slane %v1555, 2
        %v1557 = vadd.f32 %v1555, %v1556
        %v1558 = vrot.slane %v1557, 1
        %v1559 = vadd.f32 %v1557, %v1558
        %v1560 = vadd.f32 %v1270, %v1274
        %v1561 = vadd.f32 %v1560, %v1278
        %v1562 = vadd.f32 %v1561, %v1282
        %v1563 = vadd.f32 %v1562, %v1286
        %v1564 = vadd.f32 %v1563, %v1290
        %v1565 = vadd.f32 %v1564, %v1294
        %v1566 = vadd.f32 %v1565, %v1298
        %v1567 = vadd.f32 %v1566, %v1302
        %v1568 = vadd.f32 %v1567, %v1306
        %v1569 = vadd.f32 %v1568, %v1310
        %v1570 = vadd.f32 %v1569, %v1314
        %v1571 = vadd.f32 %v1570, %v1318
        %v1572 = vadd.f32 %v1571, %v1322
        %v1573 = vadd.f32 %v1572, %v1326
        %v1574 = vadd.f32 %v1573, %v1330
        %v1575 = vadd.f32 %v1574, %v1334
        %v1576 = vadd.f32 %v1575, %v1338
        %v1577 = vadd.f32 %v1576, %v1342
        %v1578 = vadd.f32 %v1577, %v1346
        %v1579 = vadd.f32 %v1578, %v1350
        %v1580 = vadd.f32 %v1579, %v1354
        %v1581 = vadd.f32 %v1580, %v1358
        %v1582 = vadd.f32 %v1581, %v1362
        %v1583 = vadd.f32 %v1582, %v1366
        %v1584 = vadd.f32 %v1583, %v1370
        %v1585 = vadd.f32 %v1584, %v1374
        %v1586 = vadd.f32 %v1585, %v1378
        %v1587 = vadd.f32 %v1586, %v1382
        %v1588 = vadd.f32 %v1587, %v1386
        %v1589 = vadd.f32 %v1588, %v1390
        %v1590 = vadd.f32 %v1589, %v1394
        %v1591 = vrot.slane %v1590, 4
        %v1592 = vadd.f32 %v1590, %v1591
        %v1593 = vrot.slane %v1592, 2
        %v1594 = vadd.f32 %v1592, %v1593
        %v1595 = vrot.slane %v1594, 1
        %v1596 = vadd.f32 %v1594, %v1595
        %v1597 = vadd.f32 %v1396, %v1400
        %v1598 = vadd.f32 %v1597, %v1404
        %v1599 = vadd.f32 %v1598, %v1408
        %v1600 = vadd.f32 %v1599, %v1412
        %v1601 = vadd.f32 %v1600, %v1416
        %v1602 = vadd.f32 %v1601, %v1420
        %v1603 = vadd.f32 %v1602, %v1424
        %v1604 = vadd.f32 %v1603, %v1428
        %v1605 = vadd.f32 %v1604, %v1432
        %v1606 = vadd.f32 %v1605, %v1436
        %v1607 = vadd.f32 %v1606, %v1440
        %v1608 = vadd.f32 %v1607, %v1444
        %v1609 = vadd.f32 %v1608, %v1448
        %v1610 = vadd.f32 %v1609, %v1452
        %v1611 = vadd.f32 %v1610, %v1456
        %v1612 = vadd.f32 %v1611, %v1460
        %v1613 = vadd.f32 %v1612, %v1464
        %v1614 = vadd.f32 %v1613, %v1468
        %v1615 = vadd.f32 %v1614, %v1472
        %v1616 = vadd.f32 %v1615, %v1476
        %v1617 = vadd.f32 %v1616, %v1480
        %v1618 = vadd.f32 %v1617, %v1484
        %v1619 = vadd.f32 %v1618, %v1488
        %v1620 = vadd.f32 %v1619, %v1492
        %v1621 = vadd.f32 %v1620, %v1496
        %v1622 = vadd.f32 %v1621, %v1500
        %v1623 = vadd.f32 %v1622, %v1504
        %v1624 = vadd.f32 %v1623, %v1508
        %v1625 = vadd.f32 %v1624, %v1512
        %v1626 = vadd.f32 %v1625, %v1516
        %v1627 = vadd.f32 %v1626, %v1520
        %v1628 = vrot.slane %v1627, 4
        %v1629 = vadd.f32 %v1627, %v1628
        %v1630 = vrot.slane %v1629, 2
        %v1631 = vadd.f32 %v1629, %v1630
        %v1632 = vrot.slane %v1631, 1
        %v1633 = vadd.f32 %v1631, %v1632
        %v1634 = vadd.f32 %v1398, %v1402
        %v1635 = vadd.f32 %v1634, %v1406
        %v1636 = vadd.f32 %v1635, %v1410
        %v1637 = vadd.f32 %v1636, %v1414
        %v1638 = vadd.f32 %v1637, %v1418
        %v1639 = vadd.f32 %v1638, %v1422
        %v1640 = vadd.f32 %v1639, %v1426
        %v1641 = vadd.f32 %v1640, %v1430
        %v1642 = vadd.f32 %v1641, %v1434
        %v1643 = vadd.f32 %v1642, %v1438
        %v1644 = vadd.f32 %v1643, %v1442
        %v1645 = vadd.f32 %v1644, %v1446
        %v1646 = vadd.f32 %v1645, %v1450
        %v1647 = vadd.f32 %v1646, %v1454
        %v1648 = vadd.f32 %v1647, %v1458
        %v1649 = vadd.f32 %v1648, %v1462
        %v1650 = vadd.f32 %v1649, %v1466
        %v1651 = vadd.f32 %v1650, %v1470
        %v1652 = vadd.f32 %v1651, %v1474
        %v1653 = vadd.f32 %v1652, %v1478
        %v1654 = vadd.f32 %v1653, %v1482
        %v1655 = vadd.f32 %v1654, %v1486
        %v1656 = vadd.f32 %v1655, %v1490
        %v1657 = vadd.f32 %v1656, %v1494
        %v1658 = vadd.f32 %v1657, %v1498
        %v1659 = vadd.f32 %v1658, %v1502
        %v1660 = vadd.f32 %v1659, %v1506
        %v1661 = vadd.f32 %v1660, %v1510
        %v1662 = vadd.f32 %v1661, %v1514
        %v1663 = vadd.f32 %v1662, %v1518
        %v1664 = vadd.f32 %v1663, %v1522
        %v1665 = vrot.slane %v1664, 4
        %v1666 = vadd.f32 %v1664, %v1665
        %v1667 = vrot.slane %v1666, 2
        %v1668 = vadd.f32 %v1666, %v1667
        %v1669 = vrot.slane %v1668, 1
        %v1670 = vadd.f32 %v1668, %v1669
        %v1671 = vrcp.pop %v1559
        %v1672 = vrcp.pop %v1596
        %v1673 = vrcp.pop %v1633
        %v1674 = vrcp.pop %v1670
        %v1675 = vmul.f32 %v1268, %v1671
        %v1676 = vmul.f32 %v1270, %v1672
        %v1677 = vmul.f32 %v1272, %v1671
        %v1678 = vmul.f32 %v1274, %v1672
        %v1679 = vmul.f32 %v1276, %v1671
        %v1680 = vmul.f32 %v1278, %v1672
        %v1681 = vmul.f32 %v1280, %v1671
        %v1682 = vmul.f32 %v1282, %v1672
        %v1683 = vmul.f32 %v1284, %v1671
        %v1684 = vmul.f32 %v1286, %v1672
        %v1685 = vmul.f32 %v1288, %v1671
        %v1686 = vmul.f32 %v1290, %v1672
        %v1687 = vmul.f32 %v1292, %v1671
        %v1688 = vmul.f32 %v1294, %v1672
        %v1689 = vmul.f32 %v1296, %v1671
        %v1690 = vmul.f32 %v1298, %v1672
        %v1691 = vmul.f32 %v1300, %v1671
        %v1692 = vmul.f32 %v1302, %v1672
        %v1693 = vmul.f32 %v1304, %v1671
        %v1694 = vmul.f32 %v1306, %v1672
        %v1695 = vmul.f32 %v1308, %v1671
        %v1696 = vmul.f32 %v1310, %v1672
        %v1697 = vmul.f32 %v1312, %v1671
        %v1698 = vmul.f32 %v1314, %v1672
        %v1699 = vmul.f32 %v1316, %v1671
        %v1700 = vmul.f32 %v1318, %v1672
        %v1701 = vmul.f32 %v1320, %v1671
        %v1702 = vmul.f32 %v1322, %v1672
        %v1703 = vmul.f32 %v1324, %v1671
        %v1704 = vmul.f32 %v1326, %v1672
        %v1705 = vmul.f32 %v1328, %v1671
        %v1706 = vmul.f32 %v1330, %v1672
        %v1707 = vmul.f32 %v1332, %v1671
        %v1708 = vmul.f32 %v1334, %v1672
        %v1709 = vmul.f32 %v1336, %v1671
        %v1710 = vmul.f32 %v1338, %v1672
        %v1711 = vmul.f32 %v1340, %v1671
        %v1712 = vmul.f32 %v1342, %v1672
        %v1713 = vmul.f32 %v1344, %v1671
        %v1714 = vmul.f32 %v1346, %v1672
        %v1715 = vmul.f32 %v1348, %v1671
        %v1716 = vmul.f32 %v1350, %v1672
        %v1717 = vmul.f32 %v1352, %v1671
        %v1718 = vmul.f32 %v1354, %v1672
        %v1719 = vmul.f32 %v1356, %v1671
        %v1720 = vmul.f32 %v1358, %v1672
        %v1721 = vmul.f32 %v1360, %v1671
        %v1722 = vmul.f32 %v1362, %v1672
        %v1723 = vmul.f32 %v1364, %v1671
        %v1724 = vmul.f32 %v1366, %v1672
        %v1725 = vmul.f32 %v1368, %v1671
        %v1726 = vmul.f32 %v1370, %v1672
        %v1727 = vmul.f32 %v1372, %v1671
        %v1728 = vmul.f32 %v1374, %v1672
        %v1729 = vmul.f32 %v1376, %v1671
        %v1730 = vmul.f32 %v1378, %v1672
        %v1731 = vmul.f32 %v1380, %v1671
        %v1732 = vmul.f32 %v1382, %v1672
        %v1733 = vmul.f32 %v1384, %v1671
        %v1734 = vmul.f32 %v1386, %v1672
        %v1735 = vmul.f32 %v1388, %v1671
        %v1736 = vmul.f32 %v1390, %v1672
        %v1737 = vmul.f32 %v1392, %v1671
        %v1738 = vmul.f32 %v1394, %v1672
        %v1739 = vmul.f32 %v1396, %v1673
        %v1740 = vmul.f32 %v1398, %v1674
        %v1741 = vmul.f32 %v1400, %v1673
        %v1742 = vmul.f32 %v1402, %v1674
        %v1743 = vmul.f32 %v1404, %v1673
        %v1744 = vmul.f32 %v1406, %v1674
        %v1745 = vmul.f32 %v1408, %v1673
        %v1746 = vmul.f32 %v1410, %v1674
        %v1747 = vmul.f32 %v1412, %v1673
        %v1748 = vmul.f32 %v1414, %v1674
        %v1749 = vmul.f32 %v1416, %v1673
        %v1750 = vmul.f32 %v1418, %v1674
        %v1751 = vmul.f32 %v1420, %v1673
        %v1752 = vmul.f32 %v1422, %v1674
        %v1753 = vmul.f32 %v1424, %v1673
        %v1754 = vmul.f32 %v1426, %v1674
        %v1755 = vmul.f32 %v1428, %v1673
        %v1756 = vmul.f32 %v1430, %v1674
        %v1757 = vmul.f32 %v1432, %v1673
        %v1758 = vmul.f32 %v1434, %v1674
        %v1759 = vmul.f32 %v1436, %v1673
        %v1760 = vmul.f32 %v1438, %v1674
        %v1761 = vmul.f32 %v1440, %v1673
        %v1762 = vmul.f32 %v1442, %v1674
        %v1763 = vmul.f32 %v1444, %v1673
        %v1764 = vmul.f32 %v1446, %v1674
        %v1765 = vmul.f32 %v1448, %v1673
        %v1766 = vmul.f32 %v1450, %v1674
        %v1767 = vmul.f32 %v1452, %v1673
        %v1768 = vmul.f32 %v1454, %v1674
        %v1769 = vmul.f32 %v1456, %v1673
        %v1770 = vmul.f32 %v1458, %v1674
        %v1771 = vmul.f32 %v1460, %v1673
        %v1772 = vmul.f32 %v1462, %v1674
        %v1773 = vmul.f32 %v1464, %v1673
        %v1774 = vmul.f32 %v1466, %v1674
        %v1775 = vmul.f32 %v1468, %v1673
        %v1776 = vmul.f32 %v1470, %v1674
        %v1777 = vmul.f32 %v1472, %v1673
        %v1778 = vmul.f32 %v1474, %v1674
        %v1779 = vmul.f32 %v1476, %v1673
        %v1780 = vmul.f32 %v1478, %v1674
        %v1781 = vmul.f32 %v1480, %v1673
        %v1782 = vmul.f32 %v1482, %v1674
        %v1783 = vmul.f32 %v1484, %v1673
        %v1784 = vmul.f32 %v1486, %v1674
        %v1785 = vmul.f32 %v1488, %v1673
        %v1786 = vmul.f32 %v1490, %v1674
        %v1787 = vmul.f32 %v1492, %v1673
        %v1788 = vmul.f32 %v1494, %v1674
        %v1789 = vmul.f32 %v1496, %v1673
        %v1790 = vmul.f32 %v1498, %v1674
        %v1791 = vmul.f32 %v1500, %v1673
        %v1792 = vmul.f32 %v1502, %v1674
        %v1793 = vmul.f32 %v1504, %v1673
        %v1794 = vmul.f32 %v1506, %v1674
        %v1795 = vmul.f32 %v1508, %v1673
        %v1796 = vmul.f32 %v1510, %v1674
        %v1797 = vmul.f32 %v1512, %v1673
        %v1798 = vmul.f32 %v1514, %v1674
        %v1799 = vmul.f32 %v1516, %v1673
        %v1800 = vmul.f32 %v1518, %v1674
        %v1801 = vmul.f32 %v1520, %v1673
        %v1802 = vmul.f32 %v1522, %v1674
        %v1803 = vpack.c.bf16 %v1677, %v1675
        %v1804 = vpack.c.bf16 %v1678, %v1676
        %v1805 = vpack.c.bf16 %v1681, %v1679
        %v1806 = vpack.c.bf16 %v1682, %v1680
        %v1807 = vpack.c.bf16 %v1685, %v1683
        %v1808 = vpack.c.bf16 %v1686, %v1684
        %v1809 = vpack.c.bf16 %v1689, %v1687
        %v1810 = vpack.c.bf16 %v1690, %v1688
        %v1811 = vpack.c.bf16 %v1693, %v1691
        %v1812 = vpack.c.bf16 %v1694, %v1692
        %v1813 = vpack.c.bf16 %v1697, %v1695
        %v1814 = vpack.c.bf16 %v1698, %v1696
        %v1815 = vpack.c.bf16 %v1701, %v1699
        %v1816 = vpack.c.bf16 %v1702, %v1700
        %v1817 = vpack.c.bf16 %v1705, %v1703
        %v1818 = vpack.c.bf16 %v1706, %v1704
        %v1819 = vpack.c.bf16 %v1709, %v1707
        %v1820 = vpack.c.bf16 %v1710, %v1708
        %v1821 = vpack.c.bf16 %v1713, %v1711
        %v1822 = vpack.c.bf16 %v1714, %v1712
        %v1823 = vpack.c.bf16 %v1717, %v1715
        %v1824 = vpack.c.bf16 %v1718, %v1716
        %v1825 = vpack.c.bf16 %v1721, %v1719
        %v1826 = vpack.c.bf16 %v1722, %v1720
        %v1827 = vpack.c.bf16 %v1725, %v1723
        %v1828 = vpack.c.bf16 %v1726, %v1724
        %v1829 = vpack.c.bf16 %v1729, %v1727
        %v1830 = vpack.c.bf16 %v1730, %v1728
        %v1831 = vpack.c.bf16 %v1733, %v1731
        %v1832 = vpack.c.bf16 %v1734, %v1732
        %v1833 = vpack.c.bf16 %v1737, %v1735
        %v1834 = vpack.c.bf16 %v1738, %v1736
        %v1835 = vpack.c.bf16 %v1741, %v1739
        %v1836 = vpack.c.bf16 %v1742, %v1740
        %v1837 = vpack.c.bf16 %v1745, %v1743
        %v1838 = vpack.c.bf16 %v1746, %v1744
        %v1839 = vpack.c.bf16 %v1749, %v1747
        %v1840 = vpack.c.bf16 %v1750, %v1748
        %v1841 = vpack.c.bf16 %v1753, %v1751
        %v1842 = vpack.c.bf16 %v1754, %v1752
        %v1843 = vpack.c.bf16 %v1757, %v1755
        %v1844 = vpack.c.bf16 %v1758, %v1756
        %v1845 = vpack.c.bf16 %v1761, %v1759
        %v1846 = vpack.c.bf16 %v1762, %v1760
        %v1847 = vpack.c.bf16 %v1765, %v1763
        %v1848 = vpack.c.bf16 %v1766, %v1764
        %v1849 = vpack.c.bf16 %v1769, %v1767
        %v1850 = vpack.c.bf16 %v1770, %v1768
        %v1851 = vpack.c.bf16 %v1773, %v1771
        %v1852 = vpack.c.bf16 %v1774, %v1772
        %v1853 = vpack.c.bf16 %v1777, %v1775
        %v1854 = vpack.c.bf16 %v1778, %v1776
        %v1855 = vpack.c.bf16 %v1781, %v1779
        %v1856 = vpack.c.bf16 %v1782, %v1780
        %v1857 = vpack.c.bf16 %v1785, %v1783
        %v1858 = vpack.c.bf16 %v1786, %v1784
        %v1859 = vpack.c.bf16 %v1789, %v1787
        %v1860 = vpack.c.bf16 %v1790, %v1788
        %v1861 = vpack.c.bf16 %v1793, %v1791
        %v1862 = vpack.c.bf16 %v1794, %v1792
        %v1863 = vpack.c.bf16 %v1797, %v1795
        %v1864 = vpack.c.bf16 %v1798, %v1796
        %v1865 = vpack.c.bf16 %v1801, %v1799
        %v1866 = vpack.c.bf16 %v1802, %v1800
        %v1868 = vunpack.c.l.s4 1983009808
        %v1869 = vunpack.c.0.s8 %v1868
        %v1870 = vlaneseq
        %v1871 = vshrl.u32 %v1870, 7
        %v1872 = vsub.s32 %v1869, %v1871
        %v1873 = vrot.slane %v393, %v1872
        %v1874 = vcombine.high %v1873, %v1873
        %1877 = vmatprep.subr.bf16.mxu0 %v1804
        %1878 = vmatpush1.bf16.msra.mxu0 %v1803
        %1879 = vmatprep.subr.bf16.mxu0 %v1806
        %1880 = vmatpush1.bf16.msra.mxu0 %v1805
        %1881 = vmatprep.subr.bf16.mxu0 %v1808
        %1882 = vmatpush1.bf16.msra.mxu0 %v1807
        %1883 = vmatprep.subr.bf16.mxu0 %v1810
        %1884 = vmatpush1.bf16.msra.mxu0 %v1809
        %1885 = vmatprep.subr.bf16.mxu0 %v1812
        %1886 = vmatpush1.bf16.msra.mxu0 %v1811
        %1887 = vmatprep.subr.bf16.mxu0 %v1814
        %1888 = vmatpush1.bf16.msra.mxu0 %v1813
        %1889 = vmatprep.subr.bf16.mxu0 %v1816
        %1890 = vmatpush1.bf16.msra.mxu0 %v1815
        %1891 = vmatprep.subr.bf16.mxu0 %v1818
        %1892 = vmatpush1.bf16.msra.mxu0 %v1817
        %1893 = vmatprep.subr.bf16.mxu0 %v1820
        %1894 = vmatpush1.bf16.msra.mxu0 %v1819
        %1895 = vmatprep.subr.bf16.mxu0 %v1822
        %1896 = vmatpush1.bf16.msra.mxu0 %v1821
        %1897 = vmatprep.subr.bf16.mxu0 %v1824
        %1898 = vmatpush1.bf16.msra.mxu0 %v1823
        %1899 = vmatprep.subr.bf16.mxu0 %v1826
        %1900 = vmatpush1.bf16.msra.mxu0 %v1825
        %1901 = vmatprep.subr.bf16.mxu0 %v1828
        %1902 = vmatpush1.bf16.msra.mxu0 %v1827
        %1903 = vmatprep.subr.bf16.mxu0 %v1830
        %1904 = vmatpush1.bf16.msra.mxu0 %v1829
        %1905 = vmatprep.subr.bf16.mxu0 %v1832
        %1906 = vmatpush1.bf16.msra.mxu0 %v1831
        %1907 = vmatprep.subr.bf16.mxu0 %v1834
        %1908 = vmatpush1.bf16.msra.mxu0 %v1833
        %1909 = vmatprep.mubr.bf16.mxu0 %v1874
        %1910 = vmatmul.mubr.bf16.gmra.mrb[0].mxu0 %v1873
        %v1911 = vpop.f32.mrb[0].mxu0
        %v1912 = vadd.f32 0.0, %v1911
        %v1913 = vpop.f32.mrb[0].mxu0
        %v1914 = vadd.f32 0.0, %v1913
        %v1915 = vpop.f32.mrb[0].mxu0
        %v1916 = vpop.f32.mrb[0].mxu0
        %1917 = vdwg.mxu0
        %v1919 = vunpack.c.l.s4 1983009808
        %v1920 = vunpack.c.0.s8 %v1919
        %v1921 = vlaneseq
        %v1922 = vshrl.u32 %v1921, 7
        %v1923 = vsub.s32 %v1920, %v1922
        %v1924 = vrot.slane %v394, %v1923
        %v1925 = vcombine.high %v1924, %v1924
        %1928 = vmatprep.subr.bf16.mxu0 %v1836
        %1929 = vmatpush1.bf16.msra.mxu0 %v1835
        %1930 = vmatprep.subr.bf16.mxu0 %v1838
        %1931 = vmatpush1.bf16.msra.mxu0 %v1837
        %1932 = vmatprep.subr.bf16.mxu0 %v1840
        %1933 = vmatpush1.bf16.msra.mxu0 %v1839
        %1934 = vmatprep.subr.bf16.mxu0 %v1842
        %1935 = vmatpush1.bf16.msra.mxu0 %v1841
        %1936 = vmatprep.subr.bf16.mxu0 %v1844
        %1937 = vmatpush1.bf16.msra.mxu0 %v1843
        %1938 = vmatprep.subr.bf16.mxu0 %v1846
        %1939 = vmatpush1.bf16.msra.mxu0 %v1845
        %1940 = vmatprep.subr.bf16.mxu0 %v1848
        %1941 = vmatpush1.bf16.msra.mxu0 %v1847
        %1942 = vmatprep.subr.bf16.mxu0 %v1850
        %1943 = vmatpush1.bf16.msra.mxu0 %v1849
        %1944 = vmatprep.subr.bf16.mxu0 %v1852
        %1945 = vmatpush1.bf16.msra.mxu0 %v1851
        %1946 = vmatprep.subr.bf16.mxu0 %v1854
        %1947 = vmatpush1.bf16.msra.mxu0 %v1853
        %1948 = vmatprep.subr.bf16.mxu0 %v1856
        %1949 = vmatpush1.bf16.msra.mxu0 %v1855
        %1950 = vmatprep.subr.bf16.mxu0 %v1858
        %1951 = vmatpush1.bf16.msra.mxu0 %v1857
        %1952 = vmatprep.subr.bf16.mxu0 %v1860
        %1953 = vmatpush1.bf16.msra.mxu0 %v1859
        %1954 = vmatprep.subr.bf16.mxu0 %v1862
        %1955 = vmatpush1.bf16.msra.mxu0 %v1861
        %1956 = vmatprep.subr.bf16.mxu0 %v1864
        %1957 = vmatpush1.bf16.msra.mxu0 %v1863
        %1958 = vmatprep.subr.bf16.mxu0 %v1866
        %1959 = vmatpush1.bf16.msra.mxu0 %v1865
        %1960 = vmatprep.mubr.bf16.mxu0 %v1925
        %1961 = vmatmul.mubr.bf16.gmra.mrb[0].mxu0 %v1924
        %v1962 = vpop.f32.mrb[0].mxu0
        %v1963 = vadd.f32 0.0, %v1962
        %v1964 = vpop.f32.mrb[0].mxu0
        %v1965 = vadd.f32 0.0, %v1964
        %v1966 = vpop.f32.mrb[0].mxu0
        %v1967 = vpop.f32.mrb[0].mxu0
        %1968 = vdwg.mxu0
        %v1973 = vcombine.low %v1912, %v1914
        %v1974 = vcombine.low %v1963, %v1965
        %v1975 = vcombine.low %v1973, %v1974
        %v1976 = vcombine.high %v1973, %v1974
        %v1979 = vpack.c.bf16 %v1975, %v1975
        %v1980 = vpack.c.bf16 %v1976, %v1976
        %v1981 = vld [vmem:[%s3] sm:$0xf]
        %v1982 = vld [vmem:[%s4] sm:$0xff]
        %1984 = vset.pattern.permute.xlu0 0
        %1985 = vperm.xlu0 %1984, %v1982
        %v1986 = vpop.permute.xlu0 %1985
        %vm1988 = vcmask 64512
        %v1990 = vsel %vm1988, %v1981, 0
        %v1993 = vsel %vm298, %v1979, 0
        %v1996 = vsel %vm298, %v1980, 0
        %1998 = vmatprep.subr.bf16.mxu0 %v1996
        %1999 = vmatpush1.bf16.msra.mxu0 %v1993
        %2000 = vmatprep.subr.bf16.mxu0 0
        %2001 = vmatpush1.bf16.msra.mxu0 0
        %2002 = vmatprep.subr.bf16.mxu0 0
        %2003 = vmatpush1.bf16.msra.mxu0 0
        %2004 = vmatprep.subr.bf16.mxu0 0
        %2005 = vmatpush1.bf16.msra.mxu0 0
        %2006 = vmatprep.subr.bf16.mxu0 0
        %2007 = vmatpush1.bf16.msra.mxu0 0
        %2008 = vmatprep.subr.bf16.mxu0 0
        %2009 = vmatpush1.bf16.msra.mxu0 0
        %2010 = vmatprep.subr.bf16.mxu0 0
        %2011 = vmatpush1.bf16.msra.mxu0 0
        %2012 = vmatprep.subr.bf16.mxu0 0
        %2013 = vmatpush1.bf16.msra.mxu0 0
        %2014 = vmatprep.subr.bf16.mxu0 0
        %2015 = vmatpush1.bf16.msra.mxu0 0
        %2016 = vmatprep.subr.bf16.mxu0 0
        %2017 = vmatpush1.bf16.msra.mxu0 0
        %2018 = vmatprep.subr.bf16.mxu0 0
        %2019 = vmatpush1.bf16.msra.mxu0 0
        %2020 = vmatprep.subr.bf16.mxu0 0
        %2021 = vmatpush1.bf16.msra.mxu0 0
        %2022 = vmatprep.subr.bf16.mxu0 0
        %2023 = vmatpush1.bf16.msra.mxu0 0
        %2024 = vmatprep.subr.bf16.mxu0 0
        %2025 = vmatpush1.bf16.msra.mxu0 0
        %2026 = vmatprep.subr.bf16.mxu0 0
        %2027 = vmatpush1.bf16.msra.mxu0 0
        %2028 = vmatprep.subr.bf16.mxu0 0
        %2029 = vmatpush1.bf16.msra.mxu0 0
        %2030 = vmatprep.mubr.bf16.mxu0 0
        %2031 = vmatmul.mubr.bf16.gmra.mrb[0].mxu0 %v1990
        %v2032 = vpop.f32.mrb[0].mxu0
        %v2033 = vadd.f32 %v1986, %v2032
        %v2034 = vpop.f32.mrb[0].mxu0
        %v2035 = vadd.f32 %v1986, %v2034
        %v2036 = vpop.f32.mrb[0].mxu0
        %v2037 = vpop.f32.mrb[0].mxu0
        %2038 = vdwg.mxu0
        %2039 = vst [vmem:[%s242] sm:$0xff] %v2033
        %2040 = vst [vmem:[%s242 + $0x8] sm:$0xff] %v2035
        %s2041 = sand.u32 %s140, 1
        %s2042 = scalar_lea.sflag [#allocation4], %s2041
        %s2043 = sand.u32 %s140, 1
        %s2044 = smul.addr %s2043, 16
        %s2045 = scalar_lea.vmem [#allocation5], %s2044
        // Predicated region
        $region45: #{tpu_custom_call.1} parent=39 // pred_check
          %p2046 = pneg %p150
        $region46: #{tpu_custom_call.1} parent=39 // pred_check_branch
          %2048 = sbr.rel (%p2046) target = $region48
        $region47: #{tpu_custom_call.1} parent=39 // pred_region
          %s2050 = ssub.s32 256, 256
          %2051 = vsyncadd %s2042, %s2050
          %s2052 = smul.addr %s22, 2
          %s2053 = smul.addr %s2052, 128
          %s2054 = scalar_lea.hbm %s5, %s2053
          %s2056 = sshll.u32 %s2045, 4
          %s2057 = int_to_ptr.vmem [resolvable:$true] %s2056
          %2059 = dma.vmem_to_hbm [thread:$0]  %s2057, 256, %s2054, %s2042
        $region48: #{tpu_custom_call.1} parent=39 // pred_fallthru
          _
      $region40: #{tpu_custom_call.1} parent=5 // pred_fallthru
        _
      %p2060 = scmp.le.s32.totalorder 2, %s17
      // Predicated region
      $region49: #{tpu_custom_call.1} parent=5 // pred_check
        %p2061 = pneg %p2060
      $region50: #{tpu_custom_call.1} parent=5 // pred_check_branch
        %2063 = sbr.rel (%p2061) target = $region52
      $region51: #{tpu_custom_call.1} parent=5 // pred_region
        %s2064 = ssub.s32 %s17, 2
        // Predicated region
        $region53: #{tpu_custom_call.1} parent=51 // pred_check
          %p2065 = pneg %p156
        $region54: #{tpu_custom_call.1} parent=51 // pred_check_branch
          %2067 = sbr.rel (%p2065) target = $region56
        $region55: #{tpu_custom_call.1} parent=51 // pred_region
          %s2068 = sand.u32 %s141, 1
          %s2069 = scalar_lea.sflag [#allocation4], %s2068
          %s2070 = sand.u32 %s141, 1
          %s2071 = smul.addr %s2070, 16
          %s2072 = scalar_lea.vmem [#allocation5], %s2071
          %2073 = dma.done %s2069, 256
        $region56: #{tpu_custom_call.1} parent=51 // pred_fallthru
          _
      $region52: #{tpu_custom_call.1} parent=5 // pred_fallthru
        _
    $region6: #{tpu_custom_call.1} parent=1 // loop_footer
      %s21 = sadd.s32 1, %s17
    $region7: #{tpu_custom_call.1} parent=1 // loop_footer_branch
      %16 = sbr.rel target = $region3
    $region8: #{tpu_custom_call.1} parent=1 // loop_exit
      _
    %2074 = vsyncpa [#allocation3], 1
    %s2075 = scalar_lea.sflag [#allocation3], 1
    %2076 = vsyncpa %s2075, 1
    %2077 = vsyncpa [#allocation4], 1
    %s2078 = scalar_lea.sflag [#allocation4], 1
    %2079 = vsyncpa %s2078, 1

</llo_original>
